<compile_context>
chip_gen: v6e
topology: v6e:2x2x1
jax: 0.10.0
libtpu: 0.0.40
codegen_flags: <defaults>
</compile_context>

<pallas_src>
import functools

import jax
import jax.numpy as jnp
import numpy as np
from jax.experimental import pallas as pl
from jax.experimental.pallas import tpu as pltpu

NEW_INDEX = jnp.array([7, 0, 1, 6, 8, 2, 5, 4, 3], dtype=jnp.int32)
POS = 24            # conv1 channels (20) padded to a sublane-aligned block per position
H1_ROWS = 9 * POS   # 216 rows of conv1 positions in the fused first matmul
FUSED_ROWS = H1_ROWS + 120   # + 120 rows of fc1-from-act contribution
LEAKY_SLOPE = 0.2   # matches F.leaky_relu(x, 0.2)


def _round_up(x, m):
    return (x + m - 1) // m * m


def leaky(x, slope=LEAKY_SLOPE):
    return jnp.where(x > 0, x, slope * x)


# ----------------------------- Pallas kernel ------------------------------ #
def discriminator_kernel(xt_ref, w1_ref, b1_ref, w2_ref, b2_ref,
                         wf1a_ref, wf2_ref, bf2_ref, wf3_ref, bf3_ref,
                         out_ref, *, adt):
    # Fused first matmul (K = c9p + ap): rows 0:216 = conv1 (9 positions x 24),
    # rows 216:336 = fc1_w[:, 30:] @ one_hot(act) + fc1_b (biases folded into b1_ref).
    h_big = (jnp.dot(w1_ref[...], xt_ref[...], preferred_element_type=jnp.float32)
             + b1_ref[...])                                      # (336, TB) f32
    h1 = leaky(h_big[0:H1_ROWS, :].astype(adt))                  # (216, TB) conv1 act
    act_fc1 = h_big[H1_ROWS:FUSED_ROWS, :]                       # (120, TB) f32, reused at fc1

    def pos(p):                               # sublane-aligned 24-row block of position p
        return h1[POS * p:POS * (p + 1), :]

    # maxpool 2x2 stride 1 (3x3 -> 2x2), pooled positions stacked along sublanes
    pooled = jnp.concatenate([
        jnp.maximum(jnp.maximum(pos(0), pos(1)), jnp.maximum(pos(3), pos(4))),  # (R,C)=(0,0)
        jnp.maximum(jnp.maximum(pos(1), pos(2)), jnp.maximum(pos(4), pos(5))),  # (0,1)
        jnp.maximum(jnp.maximum(pos(3), pos(4)), jnp.maximum(pos(6), pos(7))),  # (1,0)
        jnp.maximum(jnp.maximum(pos(4), pos(5)), jnp.maximum(pos(7), pos(8))),  # (1,1)
    ], axis=0)                                                   # (96, TB) in adt

    # conv2 (2x2, valid) as ONE matmul over the pooled stack (K = 96)
    h2 = leaky((jnp.dot(w2_ref[...], pooled, preferred_element_type=jnp.float32)
                + b2_ref[...]).astype(adt))                      # (32, TB)

    # fc1: conv part + precomputed act-part (bias already inside act_fc1)
    h3 = leaky((jnp.dot(wf1a_ref[...], h2, preferred_element_type=jnp.float32)
                + act_fc1).astype(adt))                          # (120, TB)
    h4 = leaky((jnp.dot(wf2_ref[...], h3, preferred_element_type=jnp.float32)
                + bf2_ref[...]).astype(adt))                     # (88, TB)
    logits = (jnp.dot(wf3_ref[...], h4, preferred_element_type=jnp.float32)
              + bf3_ref[...])                                    # (8, TB), row 0 real
    out_ref[...] = jax.nn.sigmoid(logits[0:1, :])                # (1, TB) lane-dense


# ----------------------- weight preprocessing (once) ----------------------- #
def prepare_params(params, input_dim, action_num, compute_dtype=jnp.float32):
    """Build fused, feature-major kernel weights from PyTorch-layout params."""
    C = input_dim
    c9 = 9 * C
    c9p = _round_up(c9, 8)
    ap = _round_up(action_num, 8)
    F = c9p + ap

    w1 = np.asarray(params['w1'], np.float32)      # (20, C, 3, 3) OIHW
    b1 = np.asarray(params['b1'], np.float32)      # (20,)
    w2 = np.asarray(params['w2'], np.float32)      # (30, 20, 2, 2) OIHW
    b2 = np.asarray(params['b2'], np.float32)      # (30,)
    fc1_w = np.asarray(params['fc1_w'], np.float32)            # (120, 30 + A)
    fc1_b = np.asarray(params['fc1_b'], np.float32)
    fc2_w = np.asarray(params['fc2_w'], np.float32)            # (84, 120)
    fc2_b = np.asarray(params['fc2_b'], np.float32)
    fc3_w = np.asarray(params['fc3_w'], np.float32).reshape(84)
    fc3_b = float(np.asarray(params['fc3_b']).reshape(()))

    # Fused first-layer weight: block-diag([conv1 block-Toeplitz, fc1 act-part]).
    # Feature columns are chan-major (col = chan*9 + pos) to match the slab, which
    # is built feature-major without any wrapper-side transpose.
    W1 = np.zeros((FUSED_ROWS, F), np.float32)
    B1 = np.zeros((FUSED_ROWS, 1), np.float32)
    for p in range(9):
        rp, cp = divmod(p, 3)
        B1[p * POS:p * POS + 20, 0] = b1
        for q in range(9):
            rq, cq = divmod(q, 3)
            dr, dc = rq - rp + 1, cq - cp + 1
            if 0 <= dr <= 2 and 0 <= dc <= 2:
                W1[p * POS:p * POS + 20, np.arange(C) * 9 + q] = w1[:, :, dr, dc]
    W1[H1_ROWS:, c9p:c9p + action_num] = fc1_w[:, 30:]
    B1[H1_ROWS:, 0] = fc1_b

    # conv2 fused over the 4 pooled positions (each a 24-row block of the pooled stack)
    W2 = np.zeros((32, 4 * POS), np.float32)
    B2 = np.zeros((32, 1), np.float32)
    B2[:30, 0] = b2
    for pp in range(4):
        R, Cc = divmod(pp, 2)
        W2[:30, pp * POS:pp * POS + 20] = w2[:, :, R, Cc]

    Wf1a = np.zeros((120, 32), np.float32)
    Wf1a[:, :30] = fc1_w[:, :30]

    Wf2 = np.zeros((88, 120), np.float32)          # pad 84 -> 88 sublanes
    Wf2[:84] = fc2_w
    Bf2 = np.zeros((88, 1), np.float32)
    Bf2[:84, 0] = fc2_b

    Wf3 = np.zeros((8, 88), np.float32)            # pad M=1 -> 8, K=84 -> 88
    Wf3[0, :84] = fc3_w
    Bf3 = np.zeros((8, 1), np.float32)
    Bf3[0, 0] = fc3_b

    cdt = compute_dtype
    return {
        'input_dim': C, 'c9p': c9p, 'ap': ap,
        'w1': jnp.asarray(W1, cdt), 'b1': jnp.asarray(B1),
        'w2': jnp.asarray(W2, cdt), 'b2': jnp.asarray(B2),
        'wf1a': jnp.asarray(Wf1a, cdt),
        'wf2': jnp.asarray(Wf2, cdt), 'bf2': jnp.asarray(Bf2),
        'wf3': jnp.asarray(Wf3, cdt), 'bf3': jnp.asarray(Bf3),
    }


# ------------------------------- JAX glue ---------------------------------- #
def process_features(tables, state, des):
    """Mirror of DiscriminatorCNN.process_features (channels-last, 3x3 flattened). Reference only."""
    state_neighbor = tables['action_state_pad'][state]                 # (B, 9)
    des_rep = jnp.broadcast_to(des[:, None], state_neighbor.shape)     # (B, 9)
    neigh_path = tables['path_feature'][state_neighbor, des_rep]       # (B, 9, pf)
    neigh_edge = tables['link_feature'][state_neighbor]                # (B, 9, lf)
    neigh_mask = tables['policy_mask_pad'][state][..., None].astype(jnp.float32)
    neigh = jnp.concatenate([neigh_path, neigh_edge, neigh_mask], -1)  # (B, 9, C)
    return neigh[:, NEW_INDEX, :]                                      # reorder to 3x3 grid


def build_kernel_input(tables, state, des, act, action_num, C, c9p, ap, dtype):
    """Feature-major (F, B) slab built batch-last from the start (no (B,F)->(F,B) transpose).

    Row layout: row = chan*9 + pos for chan in [path..., edge..., mask] (matches the
    fused W1 columns), then zero pad rows to c9p, then one_hot(act) rows (ap)."""
    B = state.shape[0]
    pf = tables['path_feature'].shape[-1]
    lf = tables['link_feature'].shape[-1]

    sn = tables['action_state_pad'][state][:, NEW_INDEX]               # (B, 9), grid order
    sn_t = sn.T                                                        # (9, B) tiny transpose
    des_b = jnp.broadcast_to(des[None, :], sn_t.shape)                 # (9, B)

    path_t = jnp.moveaxis(tables['path_feature'], -1, 0)               # (pf, S, D) tiny table
    link_t = jnp.moveaxis(tables['link_feature'], -1, 0)               # (lf, S)
    path = path_t[:, sn_t, des_b].reshape(pf * 9, B)                   # (pf*9, B) batch-last
    edge = link_t[:, sn_t].reshape(lf * 9, B)                          # (lf*9, B)
    mask = tables['policy_mask_pad'][state][:, NEW_INDEX].T.astype(jnp.float32)  # (9, B)

    parts = [path.astype(jnp.float32), edge.astype(jnp.float32), mask]
    if c9p > 9 * C:
        parts.append(jnp.zeros((c9p - 9 * C, B), jnp.float32))
    parts.append(jax.nn.one_hot(act, ap, axis=0, dtype=jnp.float32))   # (ap, B), batch-last
    feat = jnp.concatenate(parts, axis=0)                              # (F, B)
    return feat.astype(dtype)


def _pick_tiling(tile_b=None):
    """Per-generation batch tile and scoped-VMEM limit."""
    try:
        vmem_cap = int(pltpu.get_tpu_info().vmem_capacity_bytes)
    except Exception:
        vmem_cap = 64 << 20                           # conservative (v7x-sized) fallback
    if vmem_cap >= (96 << 20):                        # v5e / v6e: 128 MiB physical
        dflt_tile, limit = 4096, 96 << 20
    else:                                             # v7x: 64 MiB physical
        dflt_tile, limit = 2048, 44 << 20
    return (tile_b if tile_b is not None else dflt_tile), limit


def discriminator_forward(prep, tables, state, des, act, action_num, *, tile_b=None):
    cdt = prep['w1'].dtype
    C, c9p, ap = prep['input_dim'], prep['c9p'], prep['ap']
    B = state.shape[0]
    tile_b, vmem_limit = _pick_tiling(tile_b)

    xt = build_kernel_input(tables, state, des, act, action_num, C, c9p, ap, cdt)  # (F, B)
    F = xt.shape[0]

    # lane-aligned batch tile; cap so the 'parallel' axis has >=2 steps when the batch
    # allows it (keeps both v7x TensorCores busy; no effect on single-TC v5e/v6e).
    b128 = _round_up(B, 128)
    half = max(_round_up((b128 + 1) // 2, 128), 128)
    tile = min(_round_up(tile_b, 128), b128, half)
    Bp = _round_up(B, tile)
    if Bp != B:
        xt = jnp.pad(xt, ((0, 0), (0, Bp - B)))
    grid = (pl.cdiv(Bp, tile),)

    const = lambda i: (0, 0)   # weights/biases: same block every step -> stay VMEM-resident
    adt = cdt                  # bf16 intermediates when weights are bf16 (v6e/v7x recipe)
    # TODO(synk): for v5e one could keep adt=f32 (no bf16 VALU) while shipping bf16 weights/slab.
    kernel = functools.partial(discriminator_kernel, adt=adt)

    out = pl.pallas_call(
        kernel,
        out_shape=jax.ShapeDtypeStruct((1, Bp), jnp.float32),
        grid=grid,
        in_specs=[
            pl.BlockSpec((F, tile), lambda i: (0, i)),       # activations: batch-tiled
            pl.BlockSpec(prep['w1'].shape, const),
            pl.BlockSpec(prep['b1'].shape, const),
            pl.BlockSpec(prep['w2'].shape, const),
            pl.BlockSpec(prep['b2'].shape, const),
            pl.BlockSpec(prep['wf1a'].shape, const),
            pl.BlockSpec(prep['wf2'].shape, const),
            pl.BlockSpec(prep['bf2'].shape, const),
            pl.BlockSpec(prep['wf3'].shape, const),
            pl.BlockSpec(prep['bf3'].shape, const),
        ],
        out_specs=pl.BlockSpec((1, tile), lambda i: (0, i)),
        compiler_params=pltpu.CompilerParams(
            dimension_semantics=("parallel",),               # dual-TC sharding on v7x
            vmem_limit_bytes=int(vmem_limit)),               # raise 16/32 MiB default
    )(xt, prep['w1'], prep['b1'], prep['w2'], prep['b2'],
      prep['wf1a'], prep['wf2'], prep['bf2'], prep['wf3'], prep['bf3'])

    return out[0, :B][:, None]                               # (B, 1), like the PyTorch module


# --------------------------- pure-JAX reference ---------------------------- #
def reference_forward(params, tables, state, des, act, action_num):
    neigh = process_features(tables, state, des)                       # (B, 9, C)
    B, _, C = neigh.shape
    x = neigh.reshape(B, 3, 3, C).astype(jnp.float32)                  # NHWC
    w1 = jnp.transpose(params['w1'], (2, 3, 1, 0))                     # OIHW -> HWIO
    y = jax.lax.conv_general_dilated(x, w1, (1, 1), 'SAME',
                                     dimension_numbers=('NHWC', 'HWIO', 'NHWC'))
    y = leaky(y + params['b1'][None, None, None, :])
    y = jax.lax.reduce_window(y, -jnp.inf, jax.lax.max,
                              (1, 2, 2, 1), (1, 1, 1, 1), 'VALID')     # (B, 2, 2, 20)
    w2 = jnp.transpose(params['w2'], (2, 3, 1, 0))
    y = jax.lax.conv_general_dilated(y, w2, (1, 1), 'VALID',
                                     dimension_numbers=('NHWC', 'HWIO', 'NHWC'))
    y = leaky(y + params['b2'][None, None, None, :])
    h2 = y.reshape(B, 30)
    act_oh = jax.nn.one_hot(act, action_num, dtype=jnp.float32)
    h = jnp.concatenate([h2, act_oh], axis=1)
    h = leaky(h @ params['fc1_w'].T + params['fc1_b'])
    h = leaky(h @ params['fc2_w'].T + params['fc2_b'])
    return jax.nn.sigmoid(h @ params['fc3_w'].T + params['fc3_b'])


# --------------------------------- main ------------------------------------ #
if __name__ == "__main__":
    key = jax.random.PRNGKey(0)
    keys = jax.random.split(key, 24)

    B = 4
    action_num = 8            # action_num + 1 == 9 neighbors (3x3 grid)
    n_states = 12
    n_dest = 6
    pf, lf = 4, 3
    C = pf + lf + 1           # input_dim = path_feat + link_feat + mask = 8

    # synthetic environment tables (deterministic)
    policy_mask = (jax.random.uniform(keys[0], (n_states, action_num)) > 0.3).astype(jnp.int32)
    policy_mask_pad = jnp.concatenate(
        [policy_mask, jnp.zeros((n_states, 1), jnp.int32)], axis=1)
    action_state = jax.random.randint(keys[1], (n_states, action_num), 0, n_states)
    action_state_pad = jnp.concatenate(
        [action_state, jnp.arange(n_states, dtype=action_state.dtype)[:, None]], axis=1)
    tables = {
        'policy_mask_pad': policy_mask_pad,
        'action_state_pad': action_state_pad,
        'path_feature': jax.random.normal(keys[2], (n_states, n_dest, pf), jnp.float32),
        'link_feature': jax.random.normal(keys[3], (n_states, lf), jnp.float32),
    }

    # deterministic synthetic parameters in PyTorch layouts
    s = 0.1
    params = {
        'w1':    s * jax.random.normal(keys[4], (20, C, 3, 3), jnp.float32),    # conv1 OIHW
        'b1':    s * jax.random.normal(keys[5], (20,), jnp.float32),
        'w2':    s * jax.random.normal(keys[6], (30, 20, 2, 2), jnp.float32),   # conv2 OIHW
        'b2':    s * jax.random.normal(keys[7], (30,), jnp.float32),
        'fc1_w': s * jax.random.normal(keys[8], (120, 30 + action_num), jnp.float32),
        'fc1_b': s * jax.random.normal(keys[9], (120,), jnp.float32),
        'fc2_w': s * jax.random.normal(keys[10], (84, 120), jnp.float32),
        'fc2_b': s * jax.random.normal(keys[11], (84,), jnp.float32),
        'fc3_w': s * jax.random.normal(keys[12], (1, 84), jnp.float32),
        'fc3_b': s * jax.random.normal(keys[13], (1,), jnp.float32),
    }

    state = jax.random.randint(keys[14], (B,), 0, n_states)
    des = jax.random.randint(keys[15], (B,), 0, n_dest)
    act = jax.random.randint(keys[16], (B,), 0, action_num)

    ref = reference_forward(params, tables, state, des, act, action_num)

    # f32 compute path (exact)
    prep32 = prepare_params(params, C, action_num, compute_dtype=jnp.float32)
    prob = discriminator_forward(prep32, tables, state, des, act, action_num)
    prob = jax.block_until_ready(prob)
    np.testing.assert_allclose(np.asarray(prob), np.asarray(ref), rtol=2e-5, atol=2e-5)

    # bf16 matmul + bf16 intermediates path (f32 MXU accumulation) - fast path on v6e/v7x
    prep16 = prepare_params(params, C, action_num, compute_dtype=jnp.bfloat16)
    prob16 = discriminator_forward(prep16, tables, state, des, act, action_num)
    prob16 = jax.block_until_ready(prob16)
    np.testing.assert_allclose(np.asarray(prob16), np.asarray(ref), rtol=0, atol=5e-2)

    print("KERNEL_OK")
</pallas_src>

<mosaic_0001>
module attributes {stable_mosaic.version = 11 : i64} {
  func.func @discriminator_kernel(%arg0: i32, %arg1: memref<80x128xf32, #tpu.memory_space<vmem>>, %arg2: memref<336x80xf32, #tpu.memory_space<vmem>>, %arg3: memref<336x1xf32, #tpu.memory_space<vmem>>, %arg4: memref<32x96xf32, #tpu.memory_space<vmem>>, %arg5: memref<32x1xf32, #tpu.memory_space<vmem>>, %arg6: memref<120x32xf32, #tpu.memory_space<vmem>>, %arg7: memref<88x120xf32, #tpu.memory_space<vmem>>, %arg8: memref<88x1xf32, #tpu.memory_space<vmem>>, %arg9: memref<8x88xf32, #tpu.memory_space<vmem>>, %arg10: memref<8x1xf32, #tpu.memory_space<vmem>>, %arg11: memref<1x128xf32, #tpu.memory_space<vmem>>) attributes {dimension_semantics = [#tpu.dimension_semantics<parallel>], iteration_bounds = array<i64: 1>, scalar_prefetch = 0 : i64, scratch_operands = 0 : i64, tpu.core_type = #tpu.core_type<tc>, window_params = [{transform_indices = @transform_0, window_bounds = array<i64: 80, 128>}, {pipeline_mode = #tpu.pipeline_mode<synchronous>, transform_indices = @transform_1, window_bounds = array<i64: 336, 80>}, {pipeline_mode = #tpu.pipeline_mode<synchronous>, transform_indices = @transform_2, window_bounds = array<i64: 336, 1>}, {pipeline_mode = #tpu.pipeline_mode<synchronous>, transform_indices = @transform_3, window_bounds = array<i64: 32, 96>}, {pipeline_mode = #tpu.pipeline_mode<synchronous>, transform_indices = @transform_4, window_bounds = array<i64: 32, 1>}, {pipeline_mode = #tpu.pipeline_mode<synchronous>, transform_indices = @transform_5, window_bounds = array<i64: 120, 32>}, {pipeline_mode = #tpu.pipeline_mode<synchronous>, transform_indices = @transform_6, window_bounds = array<i64: 88, 120>}, {pipeline_mode = #tpu.pipeline_mode<synchronous>, transform_indices = @transform_7, window_bounds = array<i64: 88, 1>}, {pipeline_mode = #tpu.pipeline_mode<synchronous>, transform_indices = @transform_8, window_bounds = array<i64: 8, 88>}, {pipeline_mode = #tpu.pipeline_mode<synchronous>, transform_indices = @transform_9, window_bounds = array<i64: 8, 1>}, {transform_indices = @transform_10, window_bounds = array<i64: 1, 128>}]} {
    %c0 = arith.constant 0 : index
    %c0_0 = arith.constant 0 : index
    %0 = vector.load %arg2[%c0, %c0_0] : memref<336x80xf32, #tpu.memory_space<vmem>>, vector<336x80xf32>
    %c0_1 = arith.constant 0 : index
    %c0_2 = arith.constant 0 : index
    %1 = vector.load %arg1[%c0_1, %c0_2] : memref<80x128xf32, #tpu.memory_space<vmem>>, vector<80x128xf32>
    %cst = arith.constant dense<0.000000e+00> : vector<336x128xf32>
    %2 = tpu.matmul %0, %1, %cst {dimension_numbers = #tpu.dot_dimension_numbers<[1], [0], [0], [1], [0, 0, 1, 1], [], []>} : vector<336x80xf32>, vector<80x128xf32>, vector<336x128xf32> -> vector<336x128xf32>
    %c0_3 = arith.constant 0 : index
    %c0_4 = arith.constant 0 : index
    %3 = vector.load %arg3[%c0_3, %c0_4] : memref<336x1xf32, #tpu.memory_space<vmem>>, vector<336x1xf32>
    %4 = vector.broadcast %3 : vector<336x1xf32> to vector<336x128xf32>
    %5 = arith.addf %2, %4 : vector<336x128xf32>
    %6 = vector.extract_strided_slice %5 {offsets = [0, 0], sizes = [216, 128], strides = [1, 1]} : vector<336x128xf32> to vector<216x128xf32>
    %cst_5 = arith.constant 0.000000e+00 : f32
    %7 = vector.broadcast %cst_5 : f32 to vector<216x128xf32>
    %8 = arith.cmpf ogt, %6, %7 : vector<216x128xf32>
    %cst_6 = arith.constant 2.000000e-01 : f32
    %9 = vector.broadcast %cst_6 : f32 to vector<216x128xf32>
    %10 = arith.mulf %9, %6 : vector<216x128xf32>
    %11 = arith.select %8, %6, %10 : vector<216x128xi1>, vector<216x128xf32>
    %12 = vector.extract_strided_slice %5 {offsets = [216, 0], sizes = [120, 128], strides = [1, 1]} : vector<336x128xf32> to vector<120x128xf32>
    %13 = vector.extract_strided_slice %11 {offsets = [0, 0], sizes = [24, 128], strides = [1, 1]} : vector<216x128xf32> to vector<24x128xf32>
    %14 = vector.extract_strided_slice %11 {offsets = [24, 0], sizes = [24, 128], strides = [1, 1]} : vector<216x128xf32> to vector<24x128xf32>
    %15 = arith.maximumf %13, %14 : vector<24x128xf32>
    %16 = vector.extract_strided_slice %11 {offsets = [72, 0], sizes = [24, 128], strides = [1, 1]} : vector<216x128xf32> to vector<24x128xf32>
    %17 = vector.extract_strided_slice %11 {offsets = [96, 0], sizes = [24, 128], strides = [1, 1]} : vector<216x128xf32> to vector<24x128xf32>
    %18 = arith.maximumf %16, %17 : vector<24x128xf32>
    %19 = arith.maximumf %15, %18 : vector<24x128xf32>
    %20 = vector.extract_strided_slice %11 {offsets = [24, 0], sizes = [24, 128], strides = [1, 1]} : vector<216x128xf32> to vector<24x128xf32>
    %21 = vector.extract_strided_slice %11 {offsets = [48, 0], sizes = [24, 128], strides = [1, 1]} : vector<216x128xf32> to vector<24x128xf32>
    %22 = arith.maximumf %20, %21 : vector<24x128xf32>
    %23 = vector.extract_strided_slice %11 {offsets = [96, 0], sizes = [24, 128], strides = [1, 1]} : vector<216x128xf32> to vector<24x128xf32>
    %24 = vector.extract_strided_slice %11 {offsets = [120, 0], sizes = [24, 128], strides = [1, 1]} : vector<216x128xf32> to vector<24x128xf32>
    %25 = arith.maximumf %23, %24 : vector<24x128xf32>
    %26 = arith.maximumf %22, %25 : vector<24x128xf32>
    %27 = vector.extract_strided_slice %11 {offsets = [72, 0], sizes = [24, 128], strides = [1, 1]} : vector<216x128xf32> to vector<24x128xf32>
    %28 = vector.extract_strided_slice %11 {offsets = [96, 0], sizes = [24, 128], strides = [1, 1]} : vector<216x128xf32> to vector<24x128xf32>
    %29 = arith.maximumf %27, %28 : vector<24x128xf32>
    %30 = vector.extract_strided_slice %11 {offsets = [144, 0], sizes = [24, 128], strides = [1, 1]} : vector<216x128xf32> to vector<24x128xf32>
    %31 = vector.extract_strided_slice %11 {offsets = [168, 0], sizes = [24, 128], strides = [1, 1]} : vector<216x128xf32> to vector<24x128xf32>
    %32 = arith.maximumf %30, %31 : vector<24x128xf32>
    %33 = arith.maximumf %29, %32 : vector<24x128xf32>
    %34 = vector.extract_strided_slice %11 {offsets = [96, 0], sizes = [24, 128], strides = [1, 1]} : vector<216x128xf32> to vector<24x128xf32>
    %35 = vector.extract_strided_slice %11 {offsets = [120, 0], sizes = [24, 128], strides = [1, 1]} : vector<216x128xf32> to vector<24x128xf32>
    %36 = arith.maximumf %34, %35 : vector<24x128xf32>
    %37 = vector.extract_strided_slice %11 {offsets = [168, 0], sizes = [24, 128], strides = [1, 1]} : vector<216x128xf32> to vector<24x128xf32>
    %38 = vector.extract_strided_slice %11 {offsets = [192, 0], sizes = [24, 128], strides = [1, 1]} : vector<216x128xf32> to vector<24x128xf32>
    %39 = arith.maximumf %37, %38 : vector<24x128xf32>
    %40 = arith.maximumf %36, %39 : vector<24x128xf32>
    %41 = tpu.concatenate %19, %26, %33, %40 in 0 : vector<24x128xf32>, vector<24x128xf32>, vector<24x128xf32>, vector<24x128xf32> -> vector<96x128xf32>
    %c0_7 = arith.constant 0 : index
    %c0_8 = arith.constant 0 : index
    %42 = vector.load %arg4[%c0_7, %c0_8] : memref<32x96xf32, #tpu.memory_space<vmem>>, vector<32x96xf32>
    %cst_9 = arith.constant dense<0.000000e+00> : vector<32x128xf32>
    %43 = tpu.matmul %42, %41, %cst_9 {dimension_numbers = #tpu.dot_dimension_numbers<[1], [0], [0], [1], [0, 0, 1, 1], [], []>} : vector<32x96xf32>, vector<96x128xf32>, vector<32x128xf32> -> vector<32x128xf32>
    %c0_10 = arith.constant 0 : index
    %c0_11 = arith.constant 0 : index
    %44 = vector.load %arg5[%c0_10, %c0_11] : memref<32x1xf32, #tpu.memory_space<vmem>>, vector<32x1xf32>
    %45 = vector.broadcast %44 : vector<32x1xf32> to vector<32x128xf32>
    %46 = arith.addf %43, %45 : vector<32x128xf32>
    %cst_12 = arith.constant 0.000000e+00 : f32
    %47 = vector.broadcast %cst_12 : f32 to vector<32x128xf32>
    %48 = arith.cmpf ogt, %46, %47 : vector<32x128xf32>
    %cst_13 = arith.constant 2.000000e-01 : f32
    %49 = vector.broadcast %cst_13 : f32 to vector<32x128xf32>
    %50 = arith.mulf %49, %46 : vector<32x128xf32>
    %51 = arith.select %48, %46, %50 : vector<32x128xi1>, vector<32x128xf32>
    %c0_14 = arith.constant 0 : index
    %c0_15 = arith.constant 0 : index
    %52 = vector.load %arg6[%c0_14, %c0_15] : memref<120x32xf32, #tpu.memory_space<vmem>>, vector<120x32xf32>
    %cst_16 = arith.constant dense<0.000000e+00> : vector<120x128xf32>
    %53 = tpu.matmul %52, %51, %cst_16 {dimension_numbers = #tpu.dot_dimension_numbers<[1], [0], [0], [1], [0, 0, 1, 1], [], []>} : vector<120x32xf32>, vector<32x128xf32>, vector<120x128xf32> -> vector<120x128xf32>
    %54 = arith.addf %53, %12 : vector<120x128xf32>
    %cst_17 = arith.constant 0.000000e+00 : f32
    %55 = vector.broadcast %cst_17 : f32 to vector<120x128xf32>
    %56 = arith.cmpf ogt, %54, %55 : vector<120x128xf32>
    %cst_18 = arith.constant 2.000000e-01 : f32
    %57 = vector.broadcast %cst_18 : f32 to vector<120x128xf32>
    %58 = arith.mulf %57, %54 : vector<120x128xf32>
    %59 = arith.select %56, %54, %58 : vector<120x128xi1>, vector<120x128xf32>
    %c0_19 = arith.constant 0 : index
    %c0_20 = arith.constant 0 : index
    %60 = vector.load %arg7[%c0_19, %c0_20] : memref<88x120xf32, #tpu.memory_space<vmem>>, vector<88x120xf32>
    %cst_21 = arith.constant dense<0.000000e+00> : vector<88x128xf32>
    %61 = tpu.matmul %60, %59, %cst_21 {dimension_numbers = #tpu.dot_dimension_numbers<[1], [0], [0], [1], [0, 0, 1, 1], [], []>} : vector<88x120xf32>, vector<120x128xf32>, vector<88x128xf32> -> vector<88x128xf32>
    %c0_22 = arith.constant 0 : index
    %c0_23 = arith.constant 0 : index
    %62 = vector.load %arg8[%c0_22, %c0_23] : memref<88x1xf32, #tpu.memory_space<vmem>>, vector<88x1xf32>
    %63 = vector.broadcast %62 : vector<88x1xf32> to vector<88x128xf32>
    %64 = arith.addf %61, %63 : vector<88x128xf32>
    %cst_24 = arith.constant 0.000000e+00 : f32
    %65 = vector.broadcast %cst_24 : f32 to vector<88x128xf32>
    %66 = arith.cmpf ogt, %64, %65 : vector<88x128xf32>
    %cst_25 = arith.constant 2.000000e-01 : f32
    %67 = vector.broadcast %cst_25 : f32 to vector<88x128xf32>
    %68 = arith.mulf %67, %64 : vector<88x128xf32>
    %69 = arith.select %66, %64, %68 : vector<88x128xi1>, vector<88x128xf32>
    %c0_26 = arith.constant 0 : index
    %c0_27 = arith.constant 0 : index
    %70 = vector.load %arg9[%c0_26, %c0_27] : memref<8x88xf32, #tpu.memory_space<vmem>>, vector<8x88xf32>
    %cst_28 = arith.constant dense<0.000000e+00> : vector<8x128xf32>
    %71 = tpu.matmul %70, %69, %cst_28 {dimension_numbers = #tpu.dot_dimension_numbers<[1], [0], [0], [1], [0, 0, 1, 1], [], []>} : vector<8x88xf32>, vector<88x128xf32>, vector<8x128xf32> -> vector<8x128xf32>
    %c0_29 = arith.constant 0 : index
    %c0_30 = arith.constant 0 : index
    %72 = vector.load %arg10[%c0_29, %c0_30] : memref<8x1xf32, #tpu.memory_space<vmem>>, vector<8x1xf32>
    %73 = vector.broadcast %72 : vector<8x1xf32> to vector<8x128xf32>
    %74 = arith.addf %71, %73 : vector<8x128xf32>
    %75 = vector.extract_strided_slice %74 {offsets = [0, 0], sizes = [1, 128], strides = [1, 1]} : vector<8x128xf32> to vector<1x128xf32>
    %76 = arith.negf %75 : vector<1x128xf32>
    %77 = math.exp %76 : vector<1x128xf32>
    %cst_31 = arith.constant 1.000000e+00 : f32
    %78 = vector.broadcast %cst_31 : f32 to vector<1x128xf32>
    %79 = arith.addf %78, %77 : vector<1x128xf32>
    %80 = arith.divf %78, %79 : vector<1x128xf32>
    %c0_32 = arith.constant 0 : index
    %c0_33 = arith.constant 0 : index
    %81 = vector.load %arg11[%c0_32, %c0_33] : memref<1x128xf32, #tpu.memory_space<vmem>>, vector<1x128xf32>
    tpu.vector_store %arg11[%c0_32, %c0_33], %80 {strides = array<i32>} : memref<1x128xf32, #tpu.memory_space<vmem>>, vector<1x128xf32>,
    return
  }
  func.func @transform_0(%arg0: i32) -> (i32, i32) {
    %c0_i32 = arith.constant 0 : i32
    %c0_i32_0 = arith.constant 0 : i32
    return %c0_i32, %arg0 : i32, i32
  }
  func.func @transform_1(%arg0: i32) -> (i32, i32) {
    %c0_i32 = arith.constant 0 : i32
    %c0_i32_0 = arith.constant 0 : i32
    %c0_i32_1 = arith.constant 0 : i32
    return %c0_i32, %c0_i32_0 : i32, i32
  }
  func.func @transform_2(%arg0: i32) -> (i32, i32) {
    %c0_i32 = arith.constant 0 : i32
    %c0_i32_0 = arith.constant 0 : i32
    %c0_i32_1 = arith.constant 0 : i32
    return %c0_i32, %c0_i32_0 : i32, i32
  }
  func.func @transform_3(%arg0: i32) -> (i32, i32) {
    %c0_i32 = arith.constant 0 : i32
    %c0_i32_0 = arith.constant 0 : i32
    %c0_i32_1 = arith.constant 0 : i32
    return %c0_i32, %c0_i32_0 : i32, i32
  }
  func.func @transform_4(%arg0: i32) -> (i32, i32) {
    %c0_i32 = arith.constant 0 : i32
    %c0_i32_0 = arith.constant 0 : i32
    %c0_i32_1 = arith.constant 0 : i32
    return %c0_i32, %c0_i32_0 : i32, i32
  }
  func.func @transform_5(%arg0: i32) -> (i32, i32) {
    %c0_i32 = arith.constant 0 : i32
    %c0_i32_0 = arith.constant 0 : i32
    %c0_i32_1 = arith.constant 0 : i32
    return %c0_i32, %c0_i32_0 : i32, i32
  }
  func.func @transform_6(%arg0: i32) -> (i32, i32) {
    %c0_i32 = arith.constant 0 : i32
    %c0_i32_0 = arith.constant 0 : i32
    %c0_i32_1 = arith.constant 0 : i32
    return %c0_i32, %c0_i32_0 : i32, i32
  }
  func.func @transform_7(%arg0: i32) -> (i32, i32) {
    %c0_i32 = arith.constant 0 : i32
    %c0_i32_0 = arith.constant 0 : i32
    %c0_i32_1 = arith.constant 0 : i32
    return %c0_i32, %c0_i32_0 : i32, i32
  }
  func.func @transform_8(%arg0: i32) -> (i32, i32) {
    %c0_i32 = arith.constant 0 : i32
    %c0_i32_0 = arith.constant 0 : i32
    %c0_i32_1 = arith.constant 0 : i32
    return %c0_i32, %c0_i32_0 : i32, i32
  }
  func.func @transform_9(%arg0: i32) -> (i32, i32) {
    %c0_i32 = arith.constant 0 : i32
    %c0_i32_0 = arith.constant 0 : i32
    %c0_i32_1 = arith.constant 0 : i32
    return %c0_i32, %c0_i32_0 : i32, i32
  }
  func.func @transform_10(%arg0: i32) -> (i32, i32) {
    %c0_i32 = arith.constant 0 : i32
    %c0_i32_0 = arith.constant 0 : i32
    return %c0_i32, %arg0 : i32, i32
  }
}

</mosaic_0001>

<llo_original>
// kernel: tpu_custom_call.1
$region0: #{tpu_custom_call.1}
  #allocation0 [shape = 'u32[]', space=smem, size = 0x4, offset = 0x4, fixed_abs, tag = 'smem constant byte address 0x4 - core index']
  #allocation1 [shape = 'u32[144,128]{1,0:T(1,128)}', space=vmem, size = 0x12000, scoped, tag = 'internal scratch']
  %s0 = inlined_call_operand.vmem [shape: f32[80,128], index: 0, kind: input, shape index: {}]
  %s1 = inlined_call_operand.vmem [shape: f32[336,80], index: 1, kind: input, shape index: {}]
  %s2 = inlined_call_operand.vmem [shape: f32[336,1], index: 2, kind: input, shape index: {}]
  %s3 = inlined_call_operand.vmem [shape: f32[32,96], index: 3, kind: input, shape index: {}]
  %s4 = inlined_call_operand.vmem [shape: f32[32,1], index: 4, kind: input, shape index: {}]
  %s5 = inlined_call_operand.vmem [shape: f32[120,32], index: 5, kind: input, shape index: {}]
  %s6 = inlined_call_operand.vmem [shape: f32[88,120], index: 6, kind: input, shape index: {}]
  %s7 = inlined_call_operand.vmem [shape: f32[88,1], index: 7, kind: input, shape index: {}]
  %s8 = inlined_call_operand.vmem [shape: f32[8,88], index: 8, kind: input, shape index: {}]
  %s9 = inlined_call_operand.vmem [shape: f32[8,1], index: 9, kind: input, shape index: {}]
  %s10 = inlined_call_operand.hbm [shape: f32[1,128], index: 10, kind: output, shape index: {}]
  %s11 = sld [smem:[#allocation0]]
  $region50: #{tpu_custom_call.1} parent=0
    _
  %s13 = ssub.s32 1, %s11
  %s14 = scalar_select 0, %s13, %s11
  $region1: #{tpu_custom_call.1} parent=0
    #allocation2 [shape = 'u8[512]{0}', space=vmem, size = 0x400, scoped, tag = 'output window, operand 0, single buffered']
    #allocation3 [shape = 's32[1]{0}', space=sflag, size = 0x4, scoped, tag = 'scoped memory for tpu_custom_call.1']
    %15 = vsyncpa [#allocation3], 0
    // Predicated region
    $region2: #{tpu_custom_call.1} parent=1 // pred_check
      _
    $region3: #{tpu_custom_call.1} parent=1 // pred_check_branch
      %17 = sbr.rel (0) target = $region5
    $region4: #{tpu_custom_call.1} parent=1 // pred_region
      _
    $region5: #{tpu_custom_call.1} parent=1 // pred_fallthru
      _
    // Predicated region
    $region6: #{tpu_custom_call.1} parent=1 // pred_check
      _
    $region7: #{tpu_custom_call.1} parent=1 // pred_check_branch
      %19 = sbr.rel (0) target = $region9
    $region8: #{tpu_custom_call.1} parent=1 // pred_region
      _
    $region9: #{tpu_custom_call.1} parent=1 // pred_fallthru
      _
    // Predicated region
    $region10: #{tpu_custom_call.1} parent=1 // pred_check
      _
    $region11: #{tpu_custom_call.1} parent=1 // pred_check_branch
      %21 = sbr.rel (0) target = $region13
    $region12: #{tpu_custom_call.1} parent=1 // pred_region
      _
    $region13: #{tpu_custom_call.1} parent=1 // pred_fallthru
      _
    // Predicated region
    $region14: #{tpu_custom_call.1} parent=1 // pred_check
      _
    $region15: #{tpu_custom_call.1} parent=1 // pred_check_branch
      %23 = sbr.rel (0) target = $region17
    $region16: #{tpu_custom_call.1} parent=1 // pred_region
      _
    $region17: #{tpu_custom_call.1} parent=1 // pred_fallthru
      _
    // Predicated region
    $region18: #{tpu_custom_call.1} parent=1 // pred_check
      _
    $region19: #{tpu_custom_call.1} parent=1 // pred_check_branch
      %25 = sbr.rel (0) target = $region21
    $region20: #{tpu_custom_call.1} parent=1 // pred_region
      _
    $region21: #{tpu_custom_call.1} parent=1 // pred_fallthru
      _
    // Predicated region
    $region22: #{tpu_custom_call.1} parent=1 // pred_check
      _
    $region23: #{tpu_custom_call.1} parent=1 // pred_check_branch
      %27 = sbr.rel (0) target = $region25
    $region24: #{tpu_custom_call.1} parent=1 // pred_region
      _
    $region25: #{tpu_custom_call.1} parent=1 // pred_fallthru
      _
    // Predicated region
    $region26: #{tpu_custom_call.1} parent=1 // pred_check
      _
    $region27: #{tpu_custom_call.1} parent=1 // pred_check_branch
      %29 = sbr.rel (0) target = $region29
    $region28: #{tpu_custom_call.1} parent=1 // pred_region
      _
    $region29: #{tpu_custom_call.1} parent=1 // pred_fallthru
      _
    // Predicated region
    $region30: #{tpu_custom_call.1} parent=1 // pred_check
      _
    $region31: #{tpu_custom_call.1} parent=1 // pred_check_branch
      %31 = sbr.rel (0) target = $region33
    $region32: #{tpu_custom_call.1} parent=1 // pred_region
      _
    $region33: #{tpu_custom_call.1} parent=1 // pred_fallthru
      _
    // Predicated region
    $region34: #{tpu_custom_call.1} parent=1 // pred_check
      _
    $region35: #{tpu_custom_call.1} parent=1 // pred_check_branch
      %33 = sbr.rel (0) target = $region37
    $region36: #{tpu_custom_call.1} parent=1 // pred_region
      _
    $region37: #{tpu_custom_call.1} parent=1 // pred_fallthru
      _
    // Predicated region
    $region38: #{tpu_custom_call.1} parent=1 // pred_check
      _
    $region39: #{tpu_custom_call.1} parent=1 // pred_check_branch
      %35 = sbr.rel (0) target = $region41
    $region40: #{tpu_custom_call.1} parent=1 // pred_region
      _
    $region41: #{tpu_custom_call.1} parent=1 // pred_fallthru
      _
    %v36 = vld [vmem:[%s1] sm:$0xff]
    %v37 = vld [vmem:[%s1 + $0x8] sm:$0xff]
    %v38 = vld [vmem:[%s1 + $0x10] sm:$0xff]
    %v39 = vld [vmem:[%s1 + $0x18] sm:$0xff]
    %v40 = vld [vmem:[%s1 + $0x20] sm:$0xff]
    %v41 = vld [vmem:[%s1 + $0x28] sm:$0xff]
    %v42 = vld [vmem:[%s1 + $0x30] sm:$0xff]
    %v43 = vld [vmem:[%s1 + $0x38] sm:$0xff]
    %v44 = vld [vmem:[%s1 + $0x40] sm:$0xff]
    %v45 = vld [vmem:[%s1 + $0x48] sm:$0xff]
    %v46 = vld [vmem:[%s1 + $0x50] sm:$0xff]
    %v47 = vld [vmem:[%s1 + $0x58] sm:$0xff]
    %v48 = vld [vmem:[%s1 + $0x60] sm:$0xff]
    %v49 = vld [vmem:[%s1 + $0x68] sm:$0xff]
    %v50 = vld [vmem:[%s1 + $0x70] sm:$0xff]
    %v51 = vld [vmem:[%s1 + $0x78] sm:$0xff]
    %v52 = vld [vmem:[%s1 + $0x80] sm:$0xff]
    %v53 = vld [vmem:[%s1 + $0x88] sm:$0xff]
    %v54 = vld [vmem:[%s1 + $0x90] sm:$0xff]
    %v55 = vld [vmem:[%s1 + $0x98] sm:$0xff]
    %v56 = vld [vmem:[%s1 + $0xa0] sm:$0xff]
    %v57 = vld [vmem:[%s1 + $0xa8] sm:$0xff]
    %v58 = vld [vmem:[%s1 + $0xb0] sm:$0xff]
    %v59 = vld [vmem:[%s1 + $0xb8] sm:$0xff]
    %v60 = vld [vmem:[%s1 + $0xc0] sm:$0xff]
    %v61 = vld [vmem:[%s1 + $0xc8] sm:$0xff]
    %v62 = vld [vmem:[%s1 + $0xd0] sm:$0xff]
    %v63 = vld [vmem:[%s1 + $0xd8] sm:$0xff]
    %v64 = vld [vmem:[%s1 + $0xe0] sm:$0xff]
    %v65 = vld [vmem:[%s1 + $0xe8] sm:$0xff]
    %v66 = vld [vmem:[%s1 + $0xf0] sm:$0xff]
    %v67 = vld [vmem:[%s1 + $0xf8] sm:$0xff]
    %v68 = vld [vmem:[%s1 + $0x100] sm:$0xff]
    %v69 = vld [vmem:[%s1 + $0x108] sm:$0xff]
    %v70 = vld [vmem:[%s1 + $0x110] sm:$0xff]
    %v71 = vld [vmem:[%s1 + $0x118] sm:$0xff]
    %v72 = vld [vmem:[%s1 + $0x120] sm:$0xff]
    %v73 = vld [vmem:[%s1 + $0x128] sm:$0xff]
    %v74 = vld [vmem:[%s1 + $0x130] sm:$0xff]
    %v75 = vld [vmem:[%s1 + $0x138] sm:$0xff]
    %v76 = vld [vmem:[%s1 + $0x140] sm:$0xff]
    %v77 = vld [vmem:[%s1 + $0x148] sm:$0xff]
    %v78 = vld [vmem:[%s0] sm:$0xff]
    %v79 = vld [vmem:[%s0 + $0x8] sm:$0xff]
    %v80 = vld [vmem:[%s0 + $0x10] sm:$0xff]
    %v81 = vld [vmem:[%s0 + $0x18] sm:$0xff]
    %v82 = vld [vmem:[%s0 + $0x20] sm:$0xff]
    %v83 = vld [vmem:[%s0 + $0x28] sm:$0xff]
    %v84 = vld [vmem:[%s0 + $0x30] sm:$0xff]
    %v85 = vld [vmem:[%s0 + $0x38] sm:$0xff]
    %v86 = vld [vmem:[%s0 + $0x40] sm:$0xff]
    %v87 = vld [vmem:[%s0 + $0x48] sm:$0xff]
    %v88 = vld [vmem:[%s2] sm:$0xff]
    %v89 = vld [vmem:[%s2 + $0x8] sm:$0xff]
    %v90 = vld [vmem:[%s2 + $0x10] sm:$0xff]
    %v91 = vld [vmem:[%s2 + $0x18] sm:$0xff]
    %v92 = vld [vmem:[%s2 + $0x20] sm:$0xff]
    %v93 = vld [vmem:[%s2 + $0x28] sm:$0xff]
    %v94 = vld [vmem:[%s2 + $0x30] sm:$0xff]
    %v95 = vld [vmem:[%s2 + $0x38] sm:$0xff]
    %v96 = vld [vmem:[%s2 + $0x40] sm:$0xff]
    %v97 = vld [vmem:[%s2 + $0x48] sm:$0xff]
    %v98 = vld [vmem:[%s2 + $0x50] sm:$0xff]
    %v99 = vld [vmem:[%s2 + $0x58] sm:$0xff]
    %v100 = vld [vmem:[%s2 + $0x60] sm:$0xff]
    %v101 = vld [vmem:[%s2 + $0x68] sm:$0xff]
    %v102 = vld [vmem:[%s2 + $0x70] sm:$0xff]
    %v103 = vld [vmem:[%s2 + $0x78] sm:$0xff]
    %v104 = vld [vmem:[%s2 + $0x80] sm:$0xff]
    %v105 = vld [vmem:[%s2 + $0x88] sm:$0xff]
    %v106 = vld [vmem:[%s2 + $0x90] sm:$0xff]
    %v107 = vld [vmem:[%s2 + $0x98] sm:$0xff]
    %v108 = vld [vmem:[%s2 + $0xa0] sm:$0xff]
    %v109 = vld [vmem:[%s2 + $0xa8] sm:$0xff]
    %v110 = vld [vmem:[%s2 + $0xb0] sm:$0xff]
    %v111 = vld [vmem:[%s2 + $0xb8] sm:$0xff]
    %v112 = vld [vmem:[%s2 + $0xc0] sm:$0xff]
    %v113 = vld [vmem:[%s2 + $0xc8] sm:$0xff]
    %v114 = vld [vmem:[%s2 + $0xd0] sm:$0xff]
    %v115 = vld [vmem:[%s2 + $0xd8] sm:$0xff]
    %v116 = vld [vmem:[%s2 + $0xe0] sm:$0xff]
    %v117 = vld [vmem:[%s2 + $0xe8] sm:$0xff]
    %v118 = vld [vmem:[%s2 + $0xf0] sm:$0xff]
    %v119 = vld [vmem:[%s2 + $0xf8] sm:$0xff]
    %v120 = vld [vmem:[%s2 + $0x100] sm:$0xff]
    %v121 = vld [vmem:[%s2 + $0x108] sm:$0xff]
    %v122 = vld [vmem:[%s2 + $0x110] sm:$0xff]
    %v123 = vld [vmem:[%s2 + $0x118] sm:$0xff]
    %v124 = vld [vmem:[%s2 + $0x120] sm:$0xff]
    %v125 = vld [vmem:[%s2 + $0x128] sm:$0xff]
    %v126 = vld [vmem:[%s2 + $0x130] sm:$0xff]
    %v127 = vld [vmem:[%s2 + $0x138] sm:$0xff]
    %v128 = vld [vmem:[%s2 + $0x140] sm:$0xff]
    %v129 = vld [vmem:[%s2 + $0x148] sm:$0xff]
    %131 = vset.pattern.permute.xlu0 0
    %132 = vperm.xlu0 %131, %v88
    %v133 = vpop.permute.xlu0 %132
    %136 = vset.pattern.permute.xlu0 0
    %137 = vperm.xlu0 %136, %v89
    %v138 = vpop.permute.xlu0 %137
    %141 = vset.pattern.permute.xlu0 0
    %142 = vperm.xlu0 %141, %v90
    %v143 = vpop.permute.xlu0 %142
    %146 = vset.pattern.permute.xlu0 0
    %147 = vperm.xlu0 %146, %v91
    %v148 = vpop.permute.xlu0 %147
    %151 = vset.pattern.permute.xlu0 0
    %152 = vperm.xlu0 %151, %v92
    %v153 = vpop.permute.xlu0 %152
    %156 = vset.pattern.permute.xlu0 0
    %157 = vperm.xlu0 %156, %v93
    %v158 = vpop.permute.xlu0 %157
    %161 = vset.pattern.permute.xlu0 0
    %162 = vperm.xlu0 %161, %v94
    %v163 = vpop.permute.xlu0 %162
    %166 = vset.pattern.permute.xlu0 0
    %167 = vperm.xlu0 %166, %v95
    %v168 = vpop.permute.xlu0 %167
    %171 = vset.pattern.permute.xlu0 0
    %172 = vperm.xlu0 %171, %v96
    %v173 = vpop.permute.xlu0 %172
    %176 = vset.pattern.permute.xlu0 0
    %177 = vperm.xlu0 %176, %v97
    %v178 = vpop.permute.xlu0 %177
    %181 = vset.pattern.permute.xlu0 0
    %182 = vperm.xlu0 %181, %v98
    %v183 = vpop.permute.xlu0 %182
    %186 = vset.pattern.permute.xlu0 0
    %187 = vperm.xlu0 %186, %v99
    %v188 = vpop.permute.xlu0 %187
    %191 = vset.pattern.permute.xlu0 0
    %192 = vperm.xlu0 %191, %v100
    %v193 = vpop.permute.xlu0 %192
    %196 = vset.pattern.permute.xlu0 0
    %197 = vperm.xlu0 %196, %v101
    %v198 = vpop.permute.xlu0 %197
    %201 = vset.pattern.permute.xlu0 0
    %202 = vperm.xlu0 %201, %v102
    %v203 = vpop.permute.xlu0 %202
    %206 = vset.pattern.permute.xlu0 0
    %207 = vperm.xlu0 %206, %v103
    %v208 = vpop.permute.xlu0 %207
    %211 = vset.pattern.permute.xlu0 0
    %212 = vperm.xlu0 %211, %v104
    %v213 = vpop.permute.xlu0 %212
    %216 = vset.pattern.permute.xlu0 0
    %217 = vperm.xlu0 %216, %v105
    %v218 = vpop.permute.xlu0 %217
    %221 = vset.pattern.permute.xlu0 0
    %222 = vperm.xlu0 %221, %v106
    %v223 = vpop.permute.xlu0 %222
    %226 = vset.pattern.permute.xlu0 0
    %227 = vperm.xlu0 %226, %v107
    %v228 = vpop.permute.xlu0 %227
    %231 = vset.pattern.permute.xlu0 0
    %232 = vperm.xlu0 %231, %v108
    %v233 = vpop.permute.xlu0 %232
    %236 = vset.pattern.permute.xlu0 0
    %237 = vperm.xlu0 %236, %v109
    %v238 = vpop.permute.xlu0 %237
    %241 = vset.pattern.permute.xlu0 0
    %242 = vperm.xlu0 %241, %v110
    %v243 = vpop.permute.xlu0 %242
    %246 = vset.pattern.permute.xlu0 0
    %247 = vperm.xlu0 %246, %v111
    %v248 = vpop.permute.xlu0 %247
    %251 = vset.pattern.permute.xlu0 0
    %252 = vperm.xlu0 %251, %v112
    %v253 = vpop.permute.xlu0 %252
    %256 = vset.pattern.permute.xlu0 0
    %257 = vperm.xlu0 %256, %v113
    %v258 = vpop.permute.xlu0 %257
    %261 = vset.pattern.permute.xlu0 0
    %262 = vperm.xlu0 %261, %v114
    %v263 = vpop.permute.xlu0 %262
    %266 = vset.pattern.permute.xlu0 0
    %267 = vperm.xlu0 %266, %v115
    %v268 = vpop.permute.xlu0 %267
    %271 = vset.pattern.permute.xlu0 0
    %272 = vperm.xlu0 %271, %v116
    %v273 = vpop.permute.xlu0 %272
    %276 = vset.pattern.permute.xlu0 0
    %277 = vperm.xlu0 %276, %v117
    %v278 = vpop.permute.xlu0 %277
    %281 = vset.pattern.permute.xlu0 0
    %282 = vperm.xlu0 %281, %v118
    %v283 = vpop.permute.xlu0 %282
    %286 = vset.pattern.permute.xlu0 0
    %287 = vperm.xlu0 %286, %v119
    %v288 = vpop.permute.xlu0 %287
    %291 = vset.pattern.permute.xlu0 0
    %292 = vperm.xlu0 %291, %v120
    %v293 = vpop.permute.xlu0 %292
    %296 = vset.pattern.permute.xlu0 0
    %297 = vperm.xlu0 %296, %v121
    %v298 = vpop.permute.xlu0 %297
    %301 = vset.pattern.permute.xlu0 0
    %302 = vperm.xlu0 %301, %v122
    %v303 = vpop.permute.xlu0 %302
    %306 = vset.pattern.permute.xlu0 0
    %307 = vperm.xlu0 %306, %v123
    %v308 = vpop.permute.xlu0 %307
    %311 = vset.pattern.permute.xlu0 0
    %312 = vperm.xlu0 %311, %v124
    %v313 = vpop.permute.xlu0 %312
    %316 = vset.pattern.permute.xlu0 0
    %317 = vperm.xlu0 %316, %v125
    %v318 = vpop.permute.xlu0 %317
    %321 = vset.pattern.permute.xlu0 0
    %322 = vperm.xlu0 %321, %v126
    %v323 = vpop.permute.xlu0 %322
    %326 = vset.pattern.permute.xlu0 0
    %327 = vperm.xlu0 %326, %v127
    %v328 = vpop.permute.xlu0 %327
    %331 = vset.pattern.permute.xlu0 0
    %332 = vperm.xlu0 %331, %v128
    %v333 = vpop.permute.xlu0 %332
    %336 = vset.pattern.permute.xlu0 0
    %337 = vperm.xlu0 %336, %v129
    %v338 = vpop.permute.xlu0 %337
    %vm340 = vcmask 654336
    %v342 = vsel %vm340, %v36, 0
    %v345 = vsel %vm340, %v37, 0
    %v348 = vsel %vm340, %v38, 0
    %v351 = vsel %vm340, %v39, 0
    %v354 = vsel %vm340, %v40, 0
    %v357 = vsel %vm340, %v41, 0
    %v360 = vsel %vm340, %v42, 0
    %v363 = vsel %vm340, %v43, 0
    %v366 = vsel %vm340, %v44, 0
    %v369 = vsel %vm340, %v45, 0
    %v372 = vsel %vm340, %v46, 0
    %v375 = vsel %vm340, %v47, 0
    %v378 = vsel %vm340, %v48, 0
    %v381 = vsel %vm340, %v49, 0
    %v384 = vsel %vm340, %v50, 0
    %v387 = vsel %vm340, %v51, 0
    %v390 = vsel %vm340, %v52, 0
    %v393 = vsel %vm340, %v53, 0
    %v396 = vsel %vm340, %v54, 0
    %v399 = vsel %vm340, %v55, 0
    %v402 = vsel %vm340, %v56, 0
    %v405 = vsel %vm340, %v57, 0
    %v408 = vsel %vm340, %v58, 0
    %v411 = vsel %vm340, %v59, 0
    %v414 = vsel %vm340, %v60, 0
    %v417 = vsel %vm340, %v61, 0
    %v420 = vsel %vm340, %v62, 0
    %v423 = vsel %vm340, %v63, 0
    %v426 = vsel %vm340, %v64, 0
    %v429 = vsel %vm340, %v65, 0
    %v432 = vsel %vm340, %v66, 0
    %v435 = vsel %vm340, %v67, 0
    %v438 = vsel %vm340, %v68, 0
    %v441 = vsel %vm340, %v69, 0
    %v444 = vsel %vm340, %v70, 0
    %v447 = vsel %vm340, %v71, 0
    %v450 = vsel %vm340, %v72, 0
    %v453 = vsel %vm340, %v73, 0
    %v456 = vsel %vm340, %v74, 0
    %v459 = vsel %vm340, %v75, 0
    %v462 = vsel %vm340, %v76, 0
    %v465 = vsel %vm340, %v77, 0
    %467 = vmatprep.subr.mxu0 0.0
    %468 = vmatpush1.msra.mxu0 0.0
    %469 = vmatprep.subr.mxu0 0.0
    %470 = vmatpush1.msra.mxu0 0.0
    %471 = vmatprep.subr.mxu0 0.0
    %472 = vmatpush1.msra.mxu0 0.0
    %473 = vmatprep.subr.mxu0 0.0
    %474 = vmatpush1.msra.mxu0 0.0
    %475 = vmatprep.subr.mxu0 0.0
    %476 = vmatpush1.msra.mxu0 0.0
    %477 = vmatprep.subr.mxu0 0.0
    %478 = vmatpush1.msra.mxu0 0.0
    %479 = vmatprep.subr.mxu0 0.0
    %480 = vmatpush1.msra.mxu0 %v87
    %481 = vmatprep.subr.mxu0 0.0
    %482 = vmatpush1.msra.mxu0 %v86
    %483 = vmatprep.subr.mxu0 0.0
    %484 = vmatpush1.msra.mxu0 %v85
    %485 = vmatprep.subr.mxu0 0.0
    %486 = vmatpush1.msra.mxu0 %v84
    %487 = vmatprep.subr.mxu0 0.0
    %488 = vmatpush1.msra.mxu0 %v83
    %489 = vmatprep.subr.mxu0 0.0
    %490 = vmatpush1.msra.mxu0 %v82
    %491 = vmatprep.subr.mxu0 0.0
    %492 = vmatpush1.msra.mxu0 %v81
    %493 = vmatprep.subr.mxu0 0.0
    %494 = vmatpush1.msra.mxu0 %v80
    %495 = vmatprep.subr.mxu0 0.0
    %496 = vmatpush1.msra.mxu0 %v79
    %497 = vmatprep.subr.mxu0 0.0
    %498 = vmatpush1.msra.mxu0 %v78
    %499 = vmatprep.subr.mxu0 0.0
    %500 = vmatpush2.msra.mxu0 0.0
    %501 = vmatprep.subr.mxu0 0.0
    %502 = vmatpush2.msra.mxu0 0.0
    %503 = vmatprep.subr.mxu0 0.0
    %504 = vmatpush2.msra.mxu0 0.0
    %505 = vmatprep.subr.mxu0 0.0
    %506 = vmatpush2.msra.mxu0 0.0
    %507 = vmatprep.subr.mxu0 0.0
    %508 = vmatpush2.msra.mxu0 0.0
    %509 = vmatprep.subr.mxu0 0.0
    %510 = vmatpush2.msra.mxu0 0.0
    %511 = vmatprep.subr.mxu0 0.0
    %512 = vmatpush2.msra.mxu0 0.0
    %513 = vmatprep.subr.mxu0 0.0
    %514 = vmatpush2.msra.mxu0 0.0
    %515 = vmatprep.subr.mxu0 0.0
    %516 = vmatpush2.msra.mxu0 0.0
    %517 = vmatprep.subr.mxu0 0.0
    %518 = vmatpush2.msra.mxu0 0.0
    %519 = vmatprep.subr.mxu0 0.0
    %520 = vmatpush2.msra.mxu0 0.0
    %521 = vmatprep.subr.mxu0 0.0
    %522 = vmatpush2.msra.mxu0 0.0
    %523 = vmatprep.subr.mxu0 0.0
    %524 = vmatpush2.msra.mxu0 0.0
    %525 = vmatprep.subr.mxu0 0.0
    %526 = vmatpush2.msra.mxu0 0.0
    %527 = vmatprep.subr.mxu0 0.0
    %528 = vmatpush2.msra.mxu0 0.0
    %529 = vmatprep.subr.mxu0 0.0
    %530 = vmatpush2.msra.mxu0 0.0
    %531 = vmatprep.mubr.f32.mxu0 0.0
    %532 = vmatmul.mubr.f32.gmra.mxu0 %v342
    %v533 = vpop.f32.mrf.mxu0
    %v534 = vadd.f32 %v133, %v533
    %v535 = vpop.f32.mrf.mxu0
    %536 = vmatprep.mubr.f32.mxu0 0.0
    %537 = vmatmul.mubr.f32.gmra.mxu0 %v345
    %v538 = vpop.f32.mrf.mxu0
    %v539 = vadd.f32 %v138, %v538
    %v540 = vpop.f32.mrf.mxu0
    %541 = vmatprep.mubr.f32.mxu0 0.0
    %542 = vmatmul.mubr.f32.gmra.mxu0 %v348
    %v543 = vpop.f32.mrf.mxu0
    %v544 = vadd.f32 %v143, %v543
    %v545 = vpop.f32.mrf.mxu0
    %546 = vmatprep.mubr.f32.mxu0 0.0
    %547 = vmatmul.mubr.f32.gmra.mxu0 %v351
    %v548 = vpop.f32.mrf.mxu0
    %v549 = vadd.f32 %v148, %v548
    %v550 = vpop.f32.mrf.mxu0
    %551 = vmatprep.mubr.f32.mxu0 0.0
    %552 = vmatmul.mubr.f32.gmra.mxu0 %v354
    %v553 = vpop.f32.mrf.mxu0
    %v554 = vadd.f32 %v153, %v553
    %v555 = vpop.f32.mrf.mxu0
    %556 = vmatprep.mubr.f32.mxu0 0.0
    %557 = vmatmul.mubr.f32.gmra.mxu0 %v357
    %v558 = vpop.f32.mrf.mxu0
    %v559 = vadd.f32 %v158, %v558
    %v560 = vpop.f32.mrf.mxu0
    %561 = vmatprep.mubr.f32.mxu0 0.0
    %562 = vmatmul.mubr.f32.gmra.mxu0 %v360
    %v563 = vpop.f32.mrf.mxu0
    %v564 = vadd.f32 %v163, %v563
    %v565 = vpop.f32.mrf.mxu0
    %566 = vmatprep.mubr.f32.mxu0 0.0
    %567 = vmatmul.mubr.f32.gmra.mxu0 %v363
    %v568 = vpop.f32.mrf.mxu0
    %v569 = vadd.f32 %v168, %v568
    %v570 = vpop.f32.mrf.mxu0
    %571 = vmatprep.mubr.f32.mxu0 0.0
    %572 = vmatmul.mubr.f32.gmra.mxu0 %v366
    %v573 = vpop.f32.mrf.mxu0
    %v574 = vadd.f32 %v173, %v573
    %v575 = vpop.f32.mrf.mxu0
    %576 = vmatprep.mubr.f32.mxu0 0.0
    %577 = vmatmul.mubr.f32.gmra.mxu0 %v369
    %v578 = vpop.f32.mrf.mxu0
    %v579 = vadd.f32 %v178, %v578
    %v580 = vpop.f32.mrf.mxu0
    %581 = vmatprep.mubr.f32.mxu0 0.0
    %582 = vmatmul.mubr.f32.gmra.mxu0 %v372
    %v583 = vpop.f32.mrf.mxu0
    %v584 = vadd.f32 %v183, %v583
    %v585 = vpop.f32.mrf.mxu0
    %586 = vmatprep.mubr.f32.mxu0 0.0
    %587 = vmatmul.mubr.f32.gmra.mxu0 %v375
    %v588 = vpop.f32.mrf.mxu0
    %v589 = vadd.f32 %v188, %v588
    %v590 = vpop.f32.mrf.mxu0
    %591 = vmatprep.mubr.f32.mxu0 0.0
    %592 = vmatmul.mubr.f32.gmra.mxu0 %v378
    %v593 = vpop.f32.mrf.mxu0
    %v594 = vadd.f32 %v193, %v593
    %v595 = vpop.f32.mrf.mxu0
    %596 = vmatprep.mubr.f32.mxu0 0.0
    %597 = vmatmul.mubr.f32.gmra.mxu0 %v381
    %v598 = vpop.f32.mrf.mxu0
    %v599 = vadd.f32 %v198, %v598
    %v600 = vpop.f32.mrf.mxu0
    %601 = vmatprep.mubr.f32.mxu0 0.0
    %602 = vmatmul.mubr.f32.gmra.mxu0 %v384
    %v603 = vpop.f32.mrf.mxu0
    %v604 = vadd.f32 %v203, %v603
    %v605 = vpop.f32.mrf.mxu0
    %606 = vmatprep.mubr.f32.mxu0 0.0
    %607 = vmatmul.mubr.f32.gmra.mxu0 %v387
    %v608 = vpop.f32.mrf.mxu0
    %v609 = vadd.f32 %v208, %v608
    %v610 = vpop.f32.mrf.mxu0
    %611 = vmatprep.mubr.f32.mxu0 0.0
    %612 = vmatmul.mubr.f32.gmra.mxu0 %v390
    %v613 = vpop.f32.mrf.mxu0
    %v614 = vadd.f32 %v213, %v613
    %v615 = vpop.f32.mrf.mxu0
    %616 = vmatprep.mubr.f32.mxu0 0.0
    %617 = vmatmul.mubr.f32.gmra.mxu0 %v393
    %v618 = vpop.f32.mrf.mxu0
    %v619 = vadd.f32 %v218, %v618
    %v620 = vpop.f32.mrf.mxu0
    %621 = vmatprep.mubr.f32.mxu0 0.0
    %622 = vmatmul.mubr.f32.gmra.mxu0 %v396
    %v623 = vpop.f32.mrf.mxu0
    %v624 = vadd.f32 %v223, %v623
    %v625 = vpop.f32.mrf.mxu0
    %626 = vmatprep.mubr.f32.mxu0 0.0
    %627 = vmatmul.mubr.f32.gmra.mxu0 %v399
    %v628 = vpop.f32.mrf.mxu0
    %v629 = vadd.f32 %v228, %v628
    %v630 = vpop.f32.mrf.mxu0
    %631 = vmatprep.mubr.f32.mxu0 0.0
    %632 = vmatmul.mubr.f32.gmra.mxu0 %v402
    %v633 = vpop.f32.mrf.mxu0
    %v634 = vadd.f32 %v233, %v633
    %v635 = vpop.f32.mrf.mxu0
    %636 = vmatprep.mubr.f32.mxu0 0.0
    %637 = vmatmul.mubr.f32.gmra.mxu0 %v405
    %v638 = vpop.f32.mrf.mxu0
    %v639 = vadd.f32 %v238, %v638
    %v640 = vpop.f32.mrf.mxu0
    %641 = vmatprep.mubr.f32.mxu0 0.0
    %642 = vmatmul.mubr.f32.gmra.mxu0 %v408
    %v643 = vpop.f32.mrf.mxu0
    %v644 = vadd.f32 %v243, %v643
    %v645 = vpop.f32.mrf.mxu0
    %646 = vmatprep.mubr.f32.mxu0 0.0
    %647 = vmatmul.mubr.f32.gmra.mxu0 %v411
    %v648 = vpop.f32.mrf.mxu0
    %v649 = vadd.f32 %v248, %v648
    %v650 = vpop.f32.mrf.mxu0
    %651 = vmatprep.mubr.f32.mxu0 0.0
    %652 = vmatmul.mubr.f32.gmra.mxu0 %v414
    %v653 = vpop.f32.mrf.mxu0
    %v654 = vadd.f32 %v253, %v653
    %v655 = vpop.f32.mrf.mxu0
    %656 = vmatprep.mubr.f32.mxu0 0.0
    %657 = vmatmul.mubr.f32.gmra.mxu0 %v417
    %v658 = vpop.f32.mrf.mxu0
    %v659 = vadd.f32 %v258, %v658
    %v660 = vpop.f32.mrf.mxu0
    %661 = vmatprep.mubr.f32.mxu0 0.0
    %662 = vmatmul.mubr.f32.gmra.mxu0 %v420
    %v663 = vpop.f32.mrf.mxu0
    %v664 = vadd.f32 %v263, %v663
    %v665 = vpop.f32.mrf.mxu0
    %666 = vmatprep.mubr.f32.mxu0 0.0
    %667 = vmatmul.mubr.f32.gmra.mxu0 %v423
    %v668 = vpop.f32.mrf.mxu0
    %v669 = vadd.f32 %v268, %v668
    %v670 = vpop.f32.mrf.mxu0
    %671 = vmatprep.mubr.f32.mxu0 0.0
    %672 = vmatmul.mubr.f32.gmra.mxu0 %v426
    %v673 = vpop.f32.mrf.mxu0
    %v674 = vadd.f32 %v273, %v673
    %v675 = vpop.f32.mrf.mxu0
    %676 = vmatprep.mubr.f32.mxu0 0.0
    %677 = vmatmul.mubr.f32.gmra.mxu0 %v429
    %v678 = vpop.f32.mrf.mxu0
    %v679 = vadd.f32 %v278, %v678
    %v680 = vpop.f32.mrf.mxu0
    %681 = vmatprep.mubr.f32.mxu0 0.0
    %682 = vmatmul.mubr.f32.gmra.mxu0 %v432
    %v683 = vpop.f32.mrf.mxu0
    %v684 = vadd.f32 %v283, %v683
    %v685 = vpop.f32.mrf.mxu0
    %686 = vmatprep.mubr.f32.mxu0 0.0
    %687 = vmatmul.mubr.f32.gmra.mxu0 %v435
    %v688 = vpop.f32.mrf.mxu0
    %v689 = vadd.f32 %v288, %v688
    %v690 = vpop.f32.mrf.mxu0
    %691 = vmatprep.mubr.f32.mxu0 0.0
    %692 = vmatmul.mubr.f32.gmra.mxu0 %v438
    %v693 = vpop.f32.mrf.mxu0
    %v694 = vadd.f32 %v293, %v693
    %v695 = vpop.f32.mrf.mxu0
    %696 = vmatprep.mubr.f32.mxu0 0.0
    %697 = vmatmul.mubr.f32.gmra.mxu0 %v441
    %v698 = vpop.f32.mrf.mxu0
    %v699 = vadd.f32 %v298, %v698
    %v700 = vpop.f32.mrf.mxu0
    %701 = vmatprep.mubr.f32.mxu0 0.0
    %702 = vmatmul.mubr.f32.gmra.mxu0 %v444
    %v703 = vpop.f32.mrf.mxu0
    %v704 = vadd.f32 %v303, %v703
    %v705 = vpop.f32.mrf.mxu0
    %706 = vmatprep.mubr.f32.mxu0 0.0
    %707 = vmatmul.mubr.f32.gmra.mxu0 %v447
    %v708 = vpop.f32.mrf.mxu0
    %v709 = vadd.f32 %v308, %v708
    %v710 = vpop.f32.mrf.mxu0
    %711 = vmatprep.mubr.f32.mxu0 0.0
    %712 = vmatmul.mubr.f32.gmra.mxu0 %v450
    %v713 = vpop.f32.mrf.mxu0
    %v714 = vadd.f32 %v313, %v713
    %v715 = vpop.f32.mrf.mxu0
    %716 = vmatprep.mubr.f32.mxu0 0.0
    %717 = vmatmul.mubr.f32.gmra.mxu0 %v453
    %v718 = vpop.f32.mrf.mxu0
    %v719 = vadd.f32 %v318, %v718
    %v720 = vpop.f32.mrf.mxu0
    %721 = vmatprep.mubr.f32.mxu0 0.0
    %722 = vmatmul.mubr.f32.gmra.mxu0 %v456
    %v723 = vpop.f32.mrf.mxu0
    %v724 = vadd.f32 %v323, %v723
    %v725 = vpop.f32.mrf.mxu0
    %726 = vmatprep.mubr.f32.mxu0 0.0
    %727 = vmatmul.mubr.f32.gmra.mxu0 %v459
    %v728 = vpop.f32.mrf.mxu0
    %v729 = vadd.f32 %v328, %v728
    %v730 = vpop.f32.mrf.mxu0
    %731 = vmatprep.mubr.f32.mxu0 0.0
    %732 = vmatmul.mubr.f32.gmra.mxu0 %v462
    %v733 = vpop.f32.mrf.mxu0
    %v734 = vadd.f32 %v333, %v733
    %v735 = vpop.f32.mrf.mxu0
    %736 = vmatprep.mubr.f32.mxu0 0.0
    %737 = vmatmul.mubr.f32.gmra.mxu0 %v465
    %v738 = vpop.f32.mrf.mxu0
    %v739 = vadd.f32 %v338, %v738
    %v740 = vpop.f32.mrf.mxu0
    %741 = vdwg.mxu0
    %vm742 = vcmp.gt.f32.partialorder %v534, 0.0
    %vm743 = vcmp.gt.f32.partialorder %v539, 0.0
    %vm744 = vcmp.gt.f32.partialorder %v544, 0.0
    %vm745 = vcmp.gt.f32.partialorder %v549, 0.0
    %vm746 = vcmp.gt.f32.partialorder %v554, 0.0
    %vm747 = vcmp.gt.f32.partialorder %v559, 0.0
    %vm748 = vcmp.gt.f32.partialorder %v564, 0.0
    %vm749 = vcmp.gt.f32.partialorder %v569, 0.0
    %vm750 = vcmp.gt.f32.partialorder %v574, 0.0
    %vm751 = vcmp.gt.f32.partialorder %v579, 0.0
    %vm752 = vcmp.gt.f32.partialorder %v584, 0.0
    %vm753 = vcmp.gt.f32.partialorder %v589, 0.0
    %vm754 = vcmp.gt.f32.partialorder %v594, 0.0
    %vm755 = vcmp.gt.f32.partialorder %v599, 0.0
    %vm756 = vcmp.gt.f32.partialorder %v604, 0.0
    %vm757 = vcmp.gt.f32.partialorder %v609, 0.0
    %vm758 = vcmp.gt.f32.partialorder %v614, 0.0
    %vm759 = vcmp.gt.f32.partialorder %v619, 0.0
    %vm760 = vcmp.gt.f32.partialorder %v624, 0.0
    %vm761 = vcmp.gt.f32.partialorder %v629, 0.0
    %vm762 = vcmp.gt.f32.partialorder %v634, 0.0
    %vm763 = vcmp.gt.f32.partialorder %v639, 0.0
    %vm764 = vcmp.gt.f32.partialorder %v644, 0.0
    %vm765 = vcmp.gt.f32.partialorder %v649, 0.0
    %vm766 = vcmp.gt.f32.partialorder %v654, 0.0
    %vm767 = vcmp.gt.f32.partialorder %v659, 0.0
    %vm768 = vcmp.gt.f32.partialorder %v664, 0.0
    %v769 = vmul.f32 %v534, 0.2
    %v770 = vmul.f32 %v539, 0.2
    %v771 = vmul.f32 %v544, 0.2
    %v772 = vmul.f32 %v549, 0.2
    %v773 = vmul.f32 %v554, 0.2
    %v774 = vmul.f32 %v559, 0.2
    %v775 = vmul.f32 %v564, 0.2
    %v776 = vmul.f32 %v569, 0.2
    %v777 = vmul.f32 %v574, 0.2
    %v778 = vmul.f32 %v579, 0.2
    %v779 = vmul.f32 %v584, 0.2
    %v780 = vmul.f32 %v589, 0.2
    %v781 = vmul.f32 %v594, 0.2
    %v782 = vmul.f32 %v599, 0.2
    %v783 = vmul.f32 %v604, 0.2
    %v784 = vmul.f32 %v609, 0.2
    %v785 = vmul.f32 %v614, 0.2
    %v786 = vmul.f32 %v619, 0.2
    %v787 = vmul.f32 %v624, 0.2
    %v788 = vmul.f32 %v629, 0.2
    %v789 = vmul.f32 %v634, 0.2
    %v790 = vmul.f32 %v639, 0.2
    %v791 = vmul.f32 %v644, 0.2
    %v792 = vmul.f32 %v649, 0.2
    %v793 = vmul.f32 %v654, 0.2
    %v794 = vmul.f32 %v659, 0.2
    %v795 = vmul.f32 %v664, 0.2
    %v796 = vsel %vm742, %v534, %v769
    %v797 = vsel %vm743, %v539, %v770
    %v798 = vsel %vm744, %v544, %v771
    %v799 = vsel %vm745, %v549, %v772
    %v800 = vsel %vm746, %v554, %v773
    %v801 = vsel %vm747, %v559, %v774
    %v802 = vsel %vm748, %v564, %v775
    %v803 = vsel %vm749, %v569, %v776
    %v804 = vsel %vm750, %v574, %v777
    %v805 = vsel %vm751, %v579, %v778
    %v806 = vsel %vm752, %v584, %v779
    %v807 = vsel %vm753, %v589, %v780
    %v808 = vsel %vm754, %v594, %v781
    %v809 = vsel %vm755, %v599, %v782
    %v810 = vsel %vm756, %v604, %v783
    %v811 = vsel %vm757, %v609, %v784
    %v812 = vsel %vm758, %v614, %v785
    %v813 = vsel %vm759, %v619, %v786
    %v814 = vsel %vm760, %v624, %v787
    %v815 = vsel %vm761, %v629, %v788
    %v816 = vsel %vm762, %v634, %v789
    %v817 = vsel %vm763, %v639, %v790
    %v818 = vsel %vm764, %v644, %v791
    %v819 = vsel %vm765, %v649, %v792
    %v820 = vsel %vm766, %v654, %v793
    %v821 = vsel %vm767, %v659, %v794
    %v822 = vsel %vm768, %v664, %v795
    %v823 = vmax.f32 %v796, %v799
    %v824 = vmax.f32 %v797, %v800
    %v825 = vmax.f32 %v798, %v801
    %v826 = vmax.f32 %v805, %v808
    %v827 = vmax.f32 %v806, %v809
    %v828 = vmax.f32 %v807, %v810
    %v829 = vmax.f32 %v823, %v826
    %v830 = vmax.f32 %v824, %v827
    %v831 = vmax.f32 %v825, %v828
    %v832 = vmax.f32 %v799, %v802
    %v833 = vmax.f32 %v800, %v803
    %v834 = vmax.f32 %v801, %v804
    %v835 = vmax.f32 %v808, %v811
    %v836 = vmax.f32 %v809, %v812
    %v837 = vmax.f32 %v810, %v813
    %v838 = vmax.f32 %v832, %v835
    %v839 = vmax.f32 %v833, %v836
    %v840 = vmax.f32 %v834, %v837
    %v841 = vmax.f32 %v814, %v817
    %v842 = vmax.f32 %v815, %v818
    %v843 = vmax.f32 %v816, %v819
    %v844 = vmax.f32 %v826, %v841
    %v845 = vmax.f32 %v827, %v842
    %v846 = vmax.f32 %v828, %v843
    %v847 = vmax.f32 %v817, %v820
    %v848 = vmax.f32 %v818, %v821
    %v849 = vmax.f32 %v819, %v822
    %v850 = vmax.f32 %v835, %v847
    %v851 = vmax.f32 %v836, %v848
    %v852 = vmax.f32 %v837, %v849
    %v853 = vld [vmem:[%s3] sm:$0xff]
    %v854 = vld [vmem:[%s3 + $0x8] sm:$0xff]
    %v855 = vld [vmem:[%s3 + $0x10] sm:$0xff]
    %v856 = vld [vmem:[%s3 + $0x18] sm:$0xff]
    %v857 = vld [vmem:[%s4] sm:$0xff]
    %v858 = vld [vmem:[%s4 + $0x8] sm:$0xff]
    %v859 = vld [vmem:[%s4 + $0x10] sm:$0xff]
    %v860 = vld [vmem:[%s4 + $0x18] sm:$0xff]
    %862 = vset.pattern.permute.xlu0 0
    %863 = vperm.xlu0 %862, %v857
    %v864 = vpop.permute.xlu0 %863
    %867 = vset.pattern.permute.xlu0 0
    %868 = vperm.xlu0 %867, %v858
    %v869 = vpop.permute.xlu0 %868
    %872 = vset.pattern.permute.xlu0 0
    %873 = vperm.xlu0 %872, %v859
    %v874 = vpop.permute.xlu0 %873
    %877 = vset.pattern.permute.xlu0 0
    %878 = vperm.xlu0 %877, %v860
    %v879 = vpop.permute.xlu0 %878
    %vm881 = vcmask 785408
    %v883 = vsel %vm881, %v853, 0
    %v886 = vsel %vm881, %v854, 0
    %v889 = vsel %vm881, %v855, 0
    %v892 = vsel %vm881, %v856, 0
    %894 = vmatprep.subr.mxu0 0.0
    %895 = vmatpush1.msra.mxu0 0.0
    %896 = vmatprep.subr.mxu0 0.0
    %897 = vmatpush1.msra.mxu0 0.0
    %898 = vmatprep.subr.mxu0 0.0
    %899 = vmatpush1.msra.mxu0 0.0
    %900 = vmatprep.subr.mxu0 0.0
    %901 = vmatpush1.msra.mxu0 0.0
    %902 = vmatprep.subr.mxu0 0.0
    %903 = vmatpush1.msra.mxu0 %v852
    %904 = vmatprep.subr.mxu0 0.0
    %905 = vmatpush1.msra.mxu0 %v851
    %906 = vmatprep.subr.mxu0 0.0
    %907 = vmatpush1.msra.mxu0 %v850
    %908 = vmatprep.subr.mxu0 0.0
    %909 = vmatpush1.msra.mxu0 %v846
    %910 = vmatprep.subr.mxu0 0.0
    %911 = vmatpush1.msra.mxu0 %v845
    %912 = vmatprep.subr.mxu0 0.0
    %913 = vmatpush1.msra.mxu0 %v844
    %914 = vmatprep.subr.mxu0 0.0
    %915 = vmatpush1.msra.mxu0 %v840
    %916 = vmatprep.subr.mxu0 0.0
    %917 = vmatpush1.msra.mxu0 %v839
    %918 = vmatprep.subr.mxu0 0.0
    %919 = vmatpush1.msra.mxu0 %v838
    %920 = vmatprep.subr.mxu0 0.0
    %921 = vmatpush1.msra.mxu0 %v831
    %922 = vmatprep.subr.mxu0 0.0
    %923 = vmatpush1.msra.mxu0 %v830
    %924 = vmatprep.subr.mxu0 0.0
    %925 = vmatpush1.msra.mxu0 %v829
    %926 = vmatprep.subr.mxu0 0.0
    %927 = vmatpush2.msra.mxu0 0.0
    %928 = vmatprep.subr.mxu0 0.0
    %929 = vmatpush2.msra.mxu0 0.0
    %930 = vmatprep.subr.mxu0 0.0
    %931 = vmatpush2.msra.mxu0 0.0
    %932 = vmatprep.subr.mxu0 0.0
    %933 = vmatpush2.msra.mxu0 0.0
    %934 = vmatprep.subr.mxu0 0.0
    %935 = vmatpush2.msra.mxu0 0.0
    %936 = vmatprep.subr.mxu0 0.0
    %937 = vmatpush2.msra.mxu0 0.0
    %938 = vmatprep.subr.mxu0 0.0
    %939 = vmatpush2.msra.mxu0 0.0
    %940 = vmatprep.subr.mxu0 0.0
    %941 = vmatpush2.msra.mxu0 0.0
    %942 = vmatprep.subr.mxu0 0.0
    %943 = vmatpush2.msra.mxu0 0.0
    %944 = vmatprep.subr.mxu0 0.0
    %945 = vmatpush2.msra.mxu0 0.0
    %946 = vmatprep.subr.mxu0 0.0
    %947 = vmatpush2.msra.mxu0 0.0
    %948 = vmatprep.subr.mxu0 0.0
    %949 = vmatpush2.msra.mxu0 0.0
    %950 = vmatprep.subr.mxu0 0.0
    %951 = vmatpush2.msra.mxu0 0.0
    %952 = vmatprep.subr.mxu0 0.0
    %953 = vmatpush2.msra.mxu0 0.0
    %954 = vmatprep.subr.mxu0 0.0
    %955 = vmatpush2.msra.mxu0 0.0
    %956 = vmatprep.subr.mxu0 0.0
    %957 = vmatpush2.msra.mxu0 0.0
    %958 = vmatprep.mubr.f32.mxu0 0.0
    %959 = vmatmul.mubr.f32.gmra.mxu0 %v883
    %v960 = vpop.f32.mrf.mxu0
    %v961 = vadd.f32 %v864, %v960
    %v962 = vpop.f32.mrf.mxu0
    %963 = vmatprep.mubr.f32.mxu0 0.0
    %964 = vmatmul.mubr.f32.gmra.mxu0 %v886
    %v965 = vpop.f32.mrf.mxu0
    %v966 = vadd.f32 %v869, %v965
    %v967 = vpop.f32.mrf.mxu0
    %968 = vmatprep.mubr.f32.mxu0 0.0
    %969 = vmatmul.mubr.f32.gmra.mxu0 %v889
    %v970 = vpop.f32.mrf.mxu0
    %v971 = vadd.f32 %v874, %v970
    %v972 = vpop.f32.mrf.mxu0
    %973 = vmatprep.mubr.f32.mxu0 0.0
    %974 = vmatmul.mubr.f32.gmra.mxu0 %v892
    %v975 = vpop.f32.mrf.mxu0
    %v976 = vadd.f32 %v879, %v975
    %v977 = vpop.f32.mrf.mxu0
    %978 = vdwg.mxu0
    %vm979 = vcmp.gt.f32.partialorder %v961, 0.0
    %vm980 = vcmp.gt.f32.partialorder %v966, 0.0
    %vm981 = vcmp.gt.f32.partialorder %v971, 0.0
    %vm982 = vcmp.gt.f32.partialorder %v976, 0.0
    %v983 = vmul.f32 %v961, 0.2
    %v984 = vmul.f32 %v966, 0.2
    %v985 = vmul.f32 %v971, 0.2
    %v986 = vmul.f32 %v976, 0.2
    %v987 = vsel %vm979, %v961, %v983
    %v988 = vsel %vm980, %v966, %v984
    %v989 = vsel %vm981, %v971, %v985
    %v990 = vsel %vm982, %v976, %v986
    %v991 = vld [vmem:[%s5] sm:$0xff]
    %v992 = vld [vmem:[%s5 + $0x8] sm:$0xff]
    %v993 = vld [vmem:[%s5 + $0x10] sm:$0xff]
    %v994 = vld [vmem:[%s5 + $0x18] sm:$0xff]
    %v995 = vld [vmem:[%s5 + $0x20] sm:$0xff]
    %v996 = vld [vmem:[%s5 + $0x28] sm:$0xff]
    %v997 = vld [vmem:[%s5 + $0x30] sm:$0xff]
    %v998 = vld [vmem:[%s5 + $0x38] sm:$0xff]
    %v999 = vld [vmem:[%s5 + $0x40] sm:$0xff]
    %v1000 = vld [vmem:[%s5 + $0x48] sm:$0xff]
    %v1001 = vld [vmem:[%s5 + $0x50] sm:$0xff]
    %v1002 = vld [vmem:[%s5 + $0x58] sm:$0xff]
    %v1003 = vld [vmem:[%s5 + $0x60] sm:$0xff]
    %v1004 = vld [vmem:[%s5 + $0x68] sm:$0xff]
    %v1005 = vld [vmem:[%s5 + $0x70] sm:$0xff]
    %vm1006 = vcmask 261120
    %v1008 = vsel %vm1006, %v991, 0
    %v1011 = vsel %vm1006, %v992, 0
    %v1014 = vsel %vm1006, %v993, 0
    %v1017 = vsel %vm1006, %v994, 0
    %v1020 = vsel %vm1006, %v995, 0
    %v1023 = vsel %vm1006, %v996, 0
    %v1026 = vsel %vm1006, %v997, 0
    %v1029 = vsel %vm1006, %v998, 0
    %v1032 = vsel %vm1006, %v999, 0
    %v1035 = vsel %vm1006, %v1000, 0
    %v1038 = vsel %vm1006, %v1001, 0
    %v1041 = vsel %vm1006, %v1002, 0
    %v1044 = vsel %vm1006, %v1003, 0
    %v1047 = vsel %vm1006, %v1004, 0
    %v1050 = vsel %vm1006, %v1005, 0
    %1052 = vmatprep.subr.mxu0 0.0
    %1053 = vmatpush1.msra.mxu0 0.0
    %1054 = vmatprep.subr.mxu0 0.0
    %1055 = vmatpush1.msra.mxu0 0.0
    %1056 = vmatprep.subr.mxu0 0.0
    %1057 = vmatpush1.msra.mxu0 0.0
    %1058 = vmatprep.subr.mxu0 0.0
    %1059 = vmatpush1.msra.mxu0 0.0
    %1060 = vmatprep.subr.mxu0 0.0
    %1061 = vmatpush1.msra.mxu0 0.0
    %1062 = vmatprep.subr.mxu0 0.0
    %1063 = vmatpush1.msra.mxu0 0.0
    %1064 = vmatprep.subr.mxu0 0.0
    %1065 = vmatpush1.msra.mxu0 0.0
    %1066 = vmatprep.subr.mxu0 0.0
    %1067 = vmatpush1.msra.mxu0 0.0
    %1068 = vmatprep.subr.mxu0 0.0
    %1069 = vmatpush1.msra.mxu0 0.0
    %1070 = vmatprep.subr.mxu0 0.0
    %1071 = vmatpush1.msra.mxu0 0.0
    %1072 = vmatprep.subr.mxu0 0.0
    %1073 = vmatpush1.msra.mxu0 0.0
    %1074 = vmatprep.subr.mxu0 0.0
    %1075 = vmatpush1.msra.mxu0 0.0
    %1076 = vmatprep.subr.mxu0 0.0
    %1077 = vmatpush1.msra.mxu0 %v990
    %1078 = vmatprep.subr.mxu0 0.0
    %1079 = vmatpush1.msra.mxu0 %v989
    %1080 = vmatprep.subr.mxu0 0.0
    %1081 = vmatpush1.msra.mxu0 %v988
    %1082 = vmatprep.subr.mxu0 0.0
    %1083 = vmatpush1.msra.mxu0 %v987
    %1084 = vmatprep.subr.mxu0 0.0
    %1085 = vmatpush2.msra.mxu0 0.0
    %1086 = vmatprep.subr.mxu0 0.0
    %1087 = vmatpush2.msra.mxu0 0.0
    %1088 = vmatprep.subr.mxu0 0.0
    %1089 = vmatpush2.msra.mxu0 0.0
    %1090 = vmatprep.subr.mxu0 0.0
    %1091 = vmatpush2.msra.mxu0 0.0
    %1092 = vmatprep.subr.mxu0 0.0
    %1093 = vmatpush2.msra.mxu0 0.0
    %1094 = vmatprep.subr.mxu0 0.0
    %1095 = vmatpush2.msra.mxu0 0.0
    %1096 = vmatprep.subr.mxu0 0.0
    %1097 = vmatpush2.msra.mxu0 0.0
    %1098 = vmatprep.subr.mxu0 0.0
    %1099 = vmatpush2.msra.mxu0 0.0
    %1100 = vmatprep.subr.mxu0 0.0
    %1101 = vmatpush2.msra.mxu0 0.0
    %1102 = vmatprep.subr.mxu0 0.0
    %1103 = vmatpush2.msra.mxu0 0.0
    %1104 = vmatprep.subr.mxu0 0.0
    %1105 = vmatpush2.msra.mxu0 0.0
    %1106 = vmatprep.subr.mxu0 0.0
    %1107 = vmatpush2.msra.mxu0 0.0
    %1108 = vmatprep.subr.mxu0 0.0
    %1109 = vmatpush2.msra.mxu0 0.0
    %1110 = vmatprep.subr.mxu0 0.0
    %1111 = vmatpush2.msra.mxu0 0.0
    %1112 = vmatprep.subr.mxu0 0.0
    %1113 = vmatpush2.msra.mxu0 0.0
    %1114 = vmatprep.subr.mxu0 0.0
    %1115 = vmatpush2.msra.mxu0 0.0
    %1116 = vmatprep.mubr.f32.mxu0 0.0
    %1117 = vmatmul.mubr.f32.gmra.mxu0 %v1008
    %v1118 = vpop.f32.mrf.mxu0
    %v1119 = vadd.f32 %v669, %v1118
    %v1120 = vpop.f32.mrf.mxu0
    %1121 = vmatprep.mubr.f32.mxu0 0.0
    %1122 = vmatmul.mubr.f32.gmra.mxu0 %v1011
    %v1123 = vpop.f32.mrf.mxu0
    %v1124 = vadd.f32 %v674, %v1123
    %v1125 = vpop.f32.mrf.mxu0
    %1126 = vmatprep.mubr.f32.mxu0 0.0
    %1127 = vmatmul.mubr.f32.gmra.mxu0 %v1014
    %v1128 = vpop.f32.mrf.mxu0
    %v1129 = vadd.f32 %v679, %v1128
    %v1130 = vpop.f32.mrf.mxu0
    %1131 = vmatprep.mubr.f32.mxu0 0.0
    %1132 = vmatmul.mubr.f32.gmra.mxu0 %v1017
    %v1133 = vpop.f32.mrf.mxu0
    %v1134 = vadd.f32 %v684, %v1133
    %v1135 = vpop.f32.mrf.mxu0
    %1136 = vmatprep.mubr.f32.mxu0 0.0
    %1137 = vmatmul.mubr.f32.gmra.mxu0 %v1020
    %v1138 = vpop.f32.mrf.mxu0
    %v1139 = vadd.f32 %v689, %v1138
    %v1140 = vpop.f32.mrf.mxu0
    %1141 = vmatprep.mubr.f32.mxu0 0.0
    %1142 = vmatmul.mubr.f32.gmra.mxu0 %v1023
    %v1143 = vpop.f32.mrf.mxu0
    %v1144 = vadd.f32 %v694, %v1143
    %v1145 = vpop.f32.mrf.mxu0
    %1146 = vmatprep.mubr.f32.mxu0 0.0
    %1147 = vmatmul.mubr.f32.gmra.mxu0 %v1026
    %v1148 = vpop.f32.mrf.mxu0
    %v1149 = vadd.f32 %v699, %v1148
    %v1150 = vpop.f32.mrf.mxu0
    %1151 = vmatprep.mubr.f32.mxu0 0.0
    %1152 = vmatmul.mubr.f32.gmra.mxu0 %v1029
    %v1153 = vpop.f32.mrf.mxu0
    %v1154 = vadd.f32 %v704, %v1153
    %v1155 = vpop.f32.mrf.mxu0
    %1156 = vmatprep.mubr.f32.mxu0 0.0
    %1157 = vmatmul.mubr.f32.gmra.mxu0 %v1032
    %v1158 = vpop.f32.mrf.mxu0
    %v1159 = vadd.f32 %v709, %v1158
    %v1160 = vpop.f32.mrf.mxu0
    %1161 = vmatprep.mubr.f32.mxu0 0.0
    %1162 = vmatmul.mubr.f32.gmra.mxu0 %v1035
    %v1163 = vpop.f32.mrf.mxu0
    %v1164 = vadd.f32 %v714, %v1163
    %v1165 = vpop.f32.mrf.mxu0
    %1166 = vmatprep.mubr.f32.mxu0 0.0
    %1167 = vmatmul.mubr.f32.gmra.mxu0 %v1038
    %v1168 = vpop.f32.mrf.mxu0
    %v1169 = vadd.f32 %v719, %v1168
    %v1170 = vpop.f32.mrf.mxu0
    %1171 = vmatprep.mubr.f32.mxu0 0.0
    %1172 = vmatmul.mubr.f32.gmra.mxu0 %v1041
    %v1173 = vpop.f32.mrf.mxu0
    %v1174 = vadd.f32 %v724, %v1173
    %v1175 = vpop.f32.mrf.mxu0
    %1176 = vmatprep.mubr.f32.mxu0 0.0
    %1177 = vmatmul.mubr.f32.gmra.mxu0 %v1044
    %v1178 = vpop.f32.mrf.mxu0
    %v1179 = vadd.f32 %v729, %v1178
    %v1180 = vpop.f32.mrf.mxu0
    %1181 = vmatprep.mubr.f32.mxu0 0.0
    %1182 = vmatmul.mubr.f32.gmra.mxu0 %v1047
    %v1183 = vpop.f32.mrf.mxu0
    %v1184 = vadd.f32 %v734, %v1183
    %v1185 = vpop.f32.mrf.mxu0
    %1186 = vmatprep.mubr.f32.mxu0 0.0
    %1187 = vmatmul.mubr.f32.gmra.mxu0 %v1050
    %v1188 = vpop.f32.mrf.mxu0
    %v1189 = vadd.f32 %v739, %v1188
    %v1190 = vpop.f32.mrf.mxu0
    %1191 = vdwg.mxu0
    %vm1192 = vcmp.gt.f32.partialorder %v1119, 0.0
    %vm1193 = vcmp.gt.f32.partialorder %v1124, 0.0
    %vm1194 = vcmp.gt.f32.partialorder %v1129, 0.0
    %vm1195 = vcmp.gt.f32.partialorder %v1134, 0.0
    %vm1196 = vcmp.gt.f32.partialorder %v1139, 0.0
    %vm1197 = vcmp.gt.f32.partialorder %v1144, 0.0
    %vm1198 = vcmp.gt.f32.partialorder %v1149, 0.0
    %vm1199 = vcmp.gt.f32.partialorder %v1154, 0.0
    %vm1200 = vcmp.gt.f32.partialorder %v1159, 0.0
    %vm1201 = vcmp.gt.f32.partialorder %v1164, 0.0
    %vm1202 = vcmp.gt.f32.partialorder %v1169, 0.0
    %vm1203 = vcmp.gt.f32.partialorder %v1174, 0.0
    %vm1204 = vcmp.gt.f32.partialorder %v1179, 0.0
    %vm1205 = vcmp.gt.f32.partialorder %v1184, 0.0
    %vm1206 = vcmp.gt.f32.partialorder %v1189, 0.0
    %v1207 = vmul.f32 %v1119, 0.2
    %v1208 = vmul.f32 %v1124, 0.2
    %v1209 = vmul.f32 %v1129, 0.2
    %v1210 = vmul.f32 %v1134, 0.2
    %v1211 = vmul.f32 %v1139, 0.2
    %v1212 = vmul.f32 %v1144, 0.2
    %v1213 = vmul.f32 %v1149, 0.2
    %v1214 = vmul.f32 %v1154, 0.2
    %v1215 = vmul.f32 %v1159, 0.2
    %v1216 = vmul.f32 %v1164, 0.2
    %v1217 = vmul.f32 %v1169, 0.2
    %v1218 = vmul.f32 %v1174, 0.2
    %v1219 = vmul.f32 %v1179, 0.2
    %v1220 = vmul.f32 %v1184, 0.2
    %v1221 = vmul.f32 %v1189, 0.2
    %v1222 = vsel %vm1192, %v1119, %v1207
    %v1223 = vsel %vm1193, %v1124, %v1208
    %v1224 = vsel %vm1194, %v1129, %v1209
    %v1225 = vsel %vm1195, %v1134, %v1210
    %v1226 = vsel %vm1196, %v1139, %v1211
    %v1227 = vsel %vm1197, %v1144, %v1212
    %v1228 = vsel %vm1198, %v1149, %v1213
    %v1229 = vsel %vm1199, %v1154, %v1214
    %v1230 = vsel %vm1200, %v1159, %v1215
    %v1231 = vsel %vm1201, %v1164, %v1216
    %v1232 = vsel %vm1202, %v1169, %v1217
    %v1233 = vsel %vm1203, %v1174, %v1218
    %v1234 = vsel %vm1204, %v1179, %v1219
    %v1235 = vsel %vm1205, %v1184, %v1220
    %v1236 = vsel %vm1206, %v1189, %v1221
    %v1237 = vld [vmem:[%s6] sm:$0xff]
    %v1238 = vld [vmem:[%s6 + $0x8] sm:$0xff]
    %v1239 = vld [vmem:[%s6 + $0x10] sm:$0xff]
    %v1240 = vld [vmem:[%s6 + $0x18] sm:$0xff]
    %v1241 = vld [vmem:[%s6 + $0x20] sm:$0xff]
    %v1242 = vld [vmem:[%s6 + $0x28] sm:$0xff]
    %v1243 = vld [vmem:[%s6 + $0x30] sm:$0xff]
    %v1244 = vld [vmem:[%s6 + $0x38] sm:$0xff]
    %v1245 = vld [vmem:[%s6 + $0x40] sm:$0xff]
    %v1246 = vld [vmem:[%s6 + $0x48] sm:$0xff]
    %v1247 = vld [vmem:[%s6 + $0x50] sm:$0xff]
    %v1248 = vld [vmem:[%s7] sm:$0xff]
    %v1249 = vld [vmem:[%s7 + $0x8] sm:$0xff]
    %v1250 = vld [vmem:[%s7 + $0x10] sm:$0xff]
    %v1251 = vld [vmem:[%s7 + $0x18] sm:$0xff]
    %v1252 = vld [vmem:[%s7 + $0x20] sm:$0xff]
    %v1253 = vld [vmem:[%s7 + $0x28] sm:$0xff]
    %v1254 = vld [vmem:[%s7 + $0x30] sm:$0xff]
    %v1255 = vld [vmem:[%s7 + $0x38] sm:$0xff]
    %v1256 = vld [vmem:[%s7 + $0x40] sm:$0xff]
    %v1257 = vld [vmem:[%s7 + $0x48] sm:$0xff]
    %v1258 = vld [vmem:[%s7 + $0x50] sm:$0xff]
    %1260 = vset.pattern.permute.xlu0 0
    %1261 = vperm.xlu0 %1260, %v1248
    %v1262 = vpop.permute.xlu0 %1261
    %1265 = vset.pattern.permute.xlu0 0
    %1266 = vperm.xlu0 %1265, %v1249
    %v1267 = vpop.permute.xlu0 %1266
    %1270 = vset.pattern.permute.xlu0 0
    %1271 = vperm.xlu0 %1270, %v1250
    %v1272 = vpop.permute.xlu0 %1271
    %1275 = vset.pattern.permute.xlu0 0
    %1276 = vperm.xlu0 %1275, %v1251
    %v1277 = vpop.permute.xlu0 %1276
    %1280 = vset.pattern.permute.xlu0 0
    %1281 = vperm.xlu0 %1280, %v1252
    %v1282 = vpop.permute.xlu0 %1281
    %1285 = vset.pattern.permute.xlu0 0
    %1286 = vperm.xlu0 %1285, %v1253
    %v1287 = vpop.permute.xlu0 %1286
    %1290 = vset.pattern.permute.xlu0 0
    %1291 = vperm.xlu0 %1290, %v1254
    %v1292 = vpop.permute.xlu0 %1291
    %1295 = vset.pattern.permute.xlu0 0
    %1296 = vperm.xlu0 %1295, %v1255
    %v1297 = vpop.permute.xlu0 %1296
    %1300 = vset.pattern.permute.xlu0 0
    %1301 = vperm.xlu0 %1300, %v1256
    %v1302 = vpop.permute.xlu0 %1301
    %1305 = vset.pattern.permute.xlu0 0
    %1306 = vperm.xlu0 %1305, %v1257
    %v1307 = vpop.permute.xlu0 %1306
    %1310 = vset.pattern.permute.xlu0 0
    %1311 = vperm.xlu0 %1310, %v1258
    %v1312 = vpop.permute.xlu0 %1311
    %vm1314 = vcmask 982016
    %v1316 = vsel %vm1314, %v1237, 0
    %v1319 = vsel %vm1314, %v1238, 0
    %v1322 = vsel %vm1314, %v1239, 0
    %v1325 = vsel %vm1314, %v1240, 0
    %v1328 = vsel %vm1314, %v1241, 0
    %v1331 = vsel %vm1314, %v1242, 0
    %v1334 = vsel %vm1314, %v1243, 0
    %v1337 = vsel %vm1314, %v1244, 0
    %v1340 = vsel %vm1314, %v1245, 0
    %v1343 = vsel %vm1314, %v1246, 0
    %v1346 = vsel %vm1314, %v1247, 0
    %1348 = vmatprep.subr.mxu0 0.0
    %1349 = vmatpush1.msra.mxu0 0.0
    %1350 = vmatprep.subr.mxu0 0.0
    %1351 = vmatpush1.msra.mxu0 %v1236
    %1352 = vmatprep.subr.mxu0 0.0
    %1353 = vmatpush1.msra.mxu0 %v1235
    %1354 = vmatprep.subr.mxu0 0.0
    %1355 = vmatpush1.msra.mxu0 %v1234
    %1356 = vmatprep.subr.mxu0 0.0
    %1357 = vmatpush1.msra.mxu0 %v1233
    %1358 = vmatprep.subr.mxu0 0.0
    %1359 = vmatpush1.msra.mxu0 %v1232
    %1360 = vmatprep.subr.mxu0 0.0
    %1361 = vmatpush1.msra.mxu0 %v1231
    %1362 = vmatprep.subr.mxu0 0.0
    %1363 = vmatpush1.msra.mxu0 %v1230
    %1364 = vmatprep.subr.mxu0 0.0
    %1365 = vmatpush1.msra.mxu0 %v1229
    %1366 = vmatprep.subr.mxu0 0.0
    %1367 = vmatpush1.msra.mxu0 %v1228
    %1368 = vmatprep.subr.mxu0 0.0
    %1369 = vmatpush1.msra.mxu0 %v1227
    %1370 = vmatprep.subr.mxu0 0.0
    %1371 = vmatpush1.msra.mxu0 %v1226
    %1372 = vmatprep.subr.mxu0 0.0
    %1373 = vmatpush1.msra.mxu0 %v1225
    %1374 = vmatprep.subr.mxu0 0.0
    %1375 = vmatpush1.msra.mxu0 %v1224
    %1376 = vmatprep.subr.mxu0 0.0
    %1377 = vmatpush1.msra.mxu0 %v1223
    %1378 = vmatprep.subr.mxu0 0.0
    %1379 = vmatpush1.msra.mxu0 %v1222
    %1380 = vmatprep.subr.mxu0 0.0
    %1381 = vmatpush2.msra.mxu0 0.0
    %1382 = vmatprep.subr.mxu0 0.0
    %1383 = vmatpush2.msra.mxu0 0.0
    %1384 = vmatprep.subr.mxu0 0.0
    %1385 = vmatpush2.msra.mxu0 0.0
    %1386 = vmatprep.subr.mxu0 0.0
    %1387 = vmatpush2.msra.mxu0 0.0
    %1388 = vmatprep.subr.mxu0 0.0
    %1389 = vmatpush2.msra.mxu0 0.0
    %1390 = vmatprep.subr.mxu0 0.0
    %1391 = vmatpush2.msra.mxu0 0.0
    %1392 = vmatprep.subr.mxu0 0.0
    %1393 = vmatpush2.msra.mxu0 0.0
    %1394 = vmatprep.subr.mxu0 0.0
    %1395 = vmatpush2.msra.mxu0 0.0
    %1396 = vmatprep.subr.mxu0 0.0
    %1397 = vmatpush2.msra.mxu0 0.0
    %1398 = vmatprep.subr.mxu0 0.0
    %1399 = vmatpush2.msra.mxu0 0.0
    %1400 = vmatprep.subr.mxu0 0.0
    %1401 = vmatpush2.msra.mxu0 0.0
    %1402 = vmatprep.subr.mxu0 0.0
    %1403 = vmatpush2.msra.mxu0 0.0
    %1404 = vmatprep.subr.mxu0 0.0
    %1405 = vmatpush2.msra.mxu0 0.0
    %1406 = vmatprep.subr.mxu0 0.0
    %1407 = vmatpush2.msra.mxu0 0.0
    %1408 = vmatprep.subr.mxu0 0.0
    %1409 = vmatpush2.msra.mxu0 0.0
    %1410 = vmatprep.subr.mxu0 0.0
    %1411 = vmatpush2.msra.mxu0 0.0
    %1412 = vmatprep.mubr.f32.mxu0 0.0
    %1413 = vmatmul.mubr.f32.gmra.mxu0 %v1316
    %v1414 = vpop.f32.mrf.mxu0
    %v1415 = vadd.f32 %v1262, %v1414
    %v1416 = vpop.f32.mrf.mxu0
    %1417 = vmatprep.mubr.f32.mxu0 0.0
    %1418 = vmatmul.mubr.f32.gmra.mxu0 %v1319
    %v1419 = vpop.f32.mrf.mxu0
    %v1420 = vadd.f32 %v1267, %v1419
    %v1421 = vpop.f32.mrf.mxu0
    %1422 = vmatprep.mubr.f32.mxu0 0.0
    %1423 = vmatmul.mubr.f32.gmra.mxu0 %v1322
    %v1424 = vpop.f32.mrf.mxu0
    %v1425 = vadd.f32 %v1272, %v1424
    %v1426 = vpop.f32.mrf.mxu0
    %1427 = vmatprep.mubr.f32.mxu0 0.0
    %1428 = vmatmul.mubr.f32.gmra.mxu0 %v1325
    %v1429 = vpop.f32.mrf.mxu0
    %v1430 = vadd.f32 %v1277, %v1429
    %v1431 = vpop.f32.mrf.mxu0
    %1432 = vmatprep.mubr.f32.mxu0 0.0
    %1433 = vmatmul.mubr.f32.gmra.mxu0 %v1328
    %v1434 = vpop.f32.mrf.mxu0
    %v1435 = vadd.f32 %v1282, %v1434
    %v1436 = vpop.f32.mrf.mxu0
    %1437 = vmatprep.mubr.f32.mxu0 0.0
    %1438 = vmatmul.mubr.f32.gmra.mxu0 %v1331
    %v1439 = vpop.f32.mrf.mxu0
    %v1440 = vadd.f32 %v1287, %v1439
    %v1441 = vpop.f32.mrf.mxu0
    %1442 = vmatprep.mubr.f32.mxu0 0.0
    %1443 = vmatmul.mubr.f32.gmra.mxu0 %v1334
    %v1444 = vpop.f32.mrf.mxu0
    %v1445 = vadd.f32 %v1292, %v1444
    %v1446 = vpop.f32.mrf.mxu0
    %1447 = vmatprep.mubr.f32.mxu0 0.0
    %1448 = vmatmul.mubr.f32.gmra.mxu0 %v1337
    %v1449 = vpop.f32.mrf.mxu0
    %v1450 = vadd.f32 %v1297, %v1449
    %v1451 = vpop.f32.mrf.mxu0
    %1452 = vmatprep.mubr.f32.mxu0 0.0
    %1453 = vmatmul.mubr.f32.gmra.mxu0 %v1340
    %v1454 = vpop.f32.mrf.mxu0
    %v1455 = vadd.f32 %v1302, %v1454
    %v1456 = vpop.f32.mrf.mxu0
    %1457 = vmatprep.mubr.f32.mxu0 0.0
    %1458 = vmatmul.mubr.f32.gmra.mxu0 %v1343
    %v1459 = vpop.f32.mrf.mxu0
    %v1460 = vadd.f32 %v1307, %v1459
    %v1461 = vpop.f32.mrf.mxu0
    %1462 = vmatprep.mubr.f32.mxu0 0.0
    %1463 = vmatmul.mubr.f32.gmra.mxu0 %v1346
    %v1464 = vpop.f32.mrf.mxu0
    %v1465 = vadd.f32 %v1312, %v1464
    %v1466 = vpop.f32.mrf.mxu0
    %1467 = vdwg.mxu0
    %vm1468 = vcmp.gt.f32.partialorder %v1415, 0.0
    %vm1469 = vcmp.gt.f32.partialorder %v1420, 0.0
    %vm1470 = vcmp.gt.f32.partialorder %v1425, 0.0
    %vm1471 = vcmp.gt.f32.partialorder %v1430, 0.0
    %vm1472 = vcmp.gt.f32.partialorder %v1435, 0.0
    %vm1473 = vcmp.gt.f32.partialorder %v1440, 0.0
    %vm1474 = vcmp.gt.f32.partialorder %v1445, 0.0
    %vm1475 = vcmp.gt.f32.partialorder %v1450, 0.0
    %vm1476 = vcmp.gt.f32.partialorder %v1455, 0.0
    %vm1477 = vcmp.gt.f32.partialorder %v1460, 0.0
    %vm1478 = vcmp.gt.f32.partialorder %v1465, 0.0
    %v1479 = vmul.f32 %v1415, 0.2
    %v1480 = vmul.f32 %v1420, 0.2
    %v1481 = vmul.f32 %v1425, 0.2
    %v1482 = vmul.f32 %v1430, 0.2
    %v1483 = vmul.f32 %v1435, 0.2
    %v1484 = vmul.f32 %v1440, 0.2
    %v1485 = vmul.f32 %v1445, 0.2
    %v1486 = vmul.f32 %v1450, 0.2
    %v1487 = vmul.f32 %v1455, 0.2
    %v1488 = vmul.f32 %v1460, 0.2
    %v1489 = vmul.f32 %v1465, 0.2
    %v1490 = vsel %vm1468, %v1415, %v1479
    %v1491 = vsel %vm1469, %v1420, %v1480
    %v1492 = vsel %vm1470, %v1425, %v1481
    %v1493 = vsel %vm1471, %v1430, %v1482
    %v1494 = vsel %vm1472, %v1435, %v1483
    %v1495 = vsel %vm1473, %v1440, %v1484
    %v1496 = vsel %vm1474, %v1445, %v1485
    %v1497 = vsel %vm1475, %v1450, %v1486
    %v1498 = vsel %vm1476, %v1455, %v1487
    %v1499 = vsel %vm1477, %v1460, %v1488
    %v1500 = vsel %vm1478, %v1465, %v1489
    %v1501 = vld [vmem:[%s8] sm:$0xff]
    %v1502 = vld [vmem:[%s9] sm:$0xff]
    %1504 = vset.pattern.permute.xlu0 0
    %1505 = vperm.xlu0 %1504, %v1502
    %v1506 = vpop.permute.xlu0 %1505
    %vm1508 = vcmask 719872
    %v1510 = vsel %vm1508, %v1501, 0
    %1512 = vmatprep.subr.mxu0 0.0
    %1513 = vmatpush1.msra.mxu0 0.0
    %1514 = vmatprep.subr.mxu0 0.0
    %1515 = vmatpush1.msra.mxu0 0.0
    %1516 = vmatprep.subr.mxu0 0.0
    %1517 = vmatpush1.msra.mxu0 0.0
    %1518 = vmatprep.subr.mxu0 0.0
    %1519 = vmatpush1.msra.mxu0 0.0
    %1520 = vmatprep.subr.mxu0 0.0
    %1521 = vmatpush1.msra.mxu0 0.0
    %1522 = vmatprep.subr.mxu0 0.0
    %1523 = vmatpush1.msra.mxu0 %v1500
    %1524 = vmatprep.subr.mxu0 0.0
    %1525 = vmatpush1.msra.mxu0 %v1499
    %1526 = vmatprep.subr.mxu0 0.0
    %1527 = vmatpush1.msra.mxu0 %v1498
    %1528 = vmatprep.subr.mxu0 0.0
    %1529 = vmatpush1.msra.mxu0 %v1497
    %1530 = vmatprep.subr.mxu0 0.0
    %1531 = vmatpush1.msra.mxu0 %v1496
    %1532 = vmatprep.subr.mxu0 0.0
    %1533 = vmatpush1.msra.mxu0 %v1495
    %1534 = vmatprep.subr.mxu0 0.0
    %1535 = vmatpush1.msra.mxu0 %v1494
    %1536 = vmatprep.subr.mxu0 0.0
    %1537 = vmatpush1.msra.mxu0 %v1493
    %1538 = vmatprep.subr.mxu0 0.0
    %1539 = vmatpush1.msra.mxu0 %v1492
    %1540 = vmatprep.subr.mxu0 0.0
    %1541 = vmatpush1.msra.mxu0 %v1491
    %1542 = vmatprep.subr.mxu0 0.0
    %1543 = vmatpush1.msra.mxu0 %v1490
    %1544 = vmatprep.subr.mxu0 0.0
    %1545 = vmatpush2.msra.mxu0 0.0
    %1546 = vmatprep.subr.mxu0 0.0
    %1547 = vmatpush2.msra.mxu0 0.0
    %1548 = vmatprep.subr.mxu0 0.0
    %1549 = vmatpush2.msra.mxu0 0.0
    %1550 = vmatprep.subr.mxu0 0.0
    %1551 = vmatpush2.msra.mxu0 0.0
    %1552 = vmatprep.subr.mxu0 0.0
    %1553 = vmatpush2.msra.mxu0 0.0
    %1554 = vmatprep.subr.mxu0 0.0
    %1555 = vmatpush2.msra.mxu0 0.0
    %1556 = vmatprep.subr.mxu0 0.0
    %1557 = vmatpush2.msra.mxu0 0.0
    %1558 = vmatprep.subr.mxu0 0.0
    %1559 = vmatpush2.msra.mxu0 0.0
    %1560 = vmatprep.subr.mxu0 0.0
    %1561 = vmatpush2.msra.mxu0 0.0
    %1562 = vmatprep.subr.mxu0 0.0
    %1563 = vmatpush2.msra.mxu0 0.0
    %1564 = vmatprep.subr.mxu0 0.0
    %1565 = vmatpush2.msra.mxu0 0.0
    %1566 = vmatprep.subr.mxu0 0.0
    %1567 = vmatpush2.msra.mxu0 0.0
    %1568 = vmatprep.subr.mxu0 0.0
    %1569 = vmatpush2.msra.mxu0 0.0
    %1570 = vmatprep.subr.mxu0 0.0
    %1571 = vmatpush2.msra.mxu0 0.0
    %1572 = vmatprep.subr.mxu0 0.0
    %1573 = vmatpush2.msra.mxu0 0.0
    %1574 = vmatprep.subr.mxu0 0.0
    %1575 = vmatpush2.msra.mxu0 0.0
    %1576 = vmatprep.mubr.f32.mxu0 0.0
    %1577 = vmatmul.mubr.f32.gmra.mxu0 %v1510
    %v1578 = vpop.f32.mrf.mxu0
    %v1579 = vadd.f32 %v1506, %v1578
    %v1580 = vpop.f32.mrf.mxu0
    %1581 = vdwg.mxu0
    %v1582 = vxor.u32 %v1579, 2147483648
    %v1583 = vmul.f32 %v1582, 1.442695
    %v1584 = vpow.pop %v1583
    %v1585 = vadd.f32 %v1584, 1.0
    %v1586 = vrcp.pop %v1585
    %v1587 = vmul.f32 1.0, %v1586
    %1588 = vst [vmem:[#allocation2] sm:$0x1] %v1587
    // Predicated region
    $region42: #{tpu_custom_call.1} parent=1 // pred_check
      _
    $region43: #{tpu_custom_call.1} parent=1 // pred_check_branch
      %1590 = sbr.rel (0) target = $region45
    $region44: #{tpu_custom_call.1} parent=1 // pred_region
      %s1592 = ssub.s32 16, 16
      %1593 = vsyncadd [#allocation3], %s1592
      %s1595 = sshll.u32 [#allocation2], 4
      %s1596 = int_to_ptr.vmem [resolvable:$true] %s1595
      %1598 = dma.vmem_to_hbm [thread:$0]  %s1596, 16, %s10, [#allocation3]
    $region45: #{tpu_custom_call.1} parent=1 // pred_fallthru
      _
    // Predicated region
    $region46: #{tpu_custom_call.1} parent=1 // pred_check
      _
    $region47: #{tpu_custom_call.1} parent=1 // pred_check_branch
      %1600 = sbr.rel (0) target = $region49
    $region48: #{tpu_custom_call.1} parent=1 // pred_region
      %1601 = dma.done [#allocation3], 16
    $region49: #{tpu_custom_call.1} parent=1 // pred_fallthru
      _
    %1602 = vsyncpa [#allocation3], 1

</llo_original>
